<compile_context>
chip_gen: v5e
topology: v5e:2x2
jax: 0.10.0
libtpu: 0.0.40
codegen_flags: <defaults>
</compile_context>

<pallas_src>
import jax
import jax.numpy as jnp
from jax import lax
from jax.experimental import pallas as pl
from jax.experimental.pallas import tpu as pltpu

LANE = 128      # vreg lane width
SUBLANE = 8     # vreg sublane width (f32)


def _round_up(x, m):
    return ((x + m - 1) // m) * m


def _make_lstm_kernel(t_actual, t_chunk, needs_mask):
    """Kernel factory.  One grid step == `t_chunk` LSTM timesteps.

    gx_ref  : (Tc, Bp, 4*Hp) f32   precomputed x @ W_ih^T + (b_ih + b_hh)
    whh_ref : (Hp, 4*Hp)     bf16  hidden->gates weights (gate-padded layout)
    h_ref   : (Bp, Hp)       f32   VMEM-resident output; carries h across grid
    c_ref   : (Bp, Hp)       f32   VMEM-resident output; carries c across grid
    """

    def kernel(gx_ref, whh_ref, h_ref, c_ref):
        chunk = pl.program_id(0)

        @pl.when(chunk == 0)
        def _init():
            h_ref[...] = jnp.zeros_like(h_ref)
            c_ref[...] = jnp.zeros_like(c_ref)

        hp = h_ref.shape[-1]
        whh = whh_ref[...]                      # (Hp, 4Hp) bf16, VMEM-resident

        def step(t, carry):
            h_prev, c_prev = carry
            gx = gx_ref[t]                      # (Bp, 4Hp) f32, bias included
            gates = gx + jnp.dot(h_prev.astype(whh.dtype), whh,
                                 preferred_element_type=jnp.float32)
            # PyTorch gate order: i, f, g, o -- each gate is a lane-aligned
            # Hp-wide column block.
            i_g = jax.nn.sigmoid(gates[:, 0 * hp:1 * hp])
            f_g = jax.nn.sigmoid(gates[:, 1 * hp:2 * hp])
            g_g = jnp.tanh(gates[:, 2 * hp:3 * hp])
            o_g = jax.nn.sigmoid(gates[:, 3 * hp:4 * hp])
            c_new = f_g * c_prev + i_g * g_g
            h_new = o_g * jnp.tanh(c_new)
            if needs_mask:
                # Only present when T was padded up to a multiple of Tc:
                # padded steps keep the previous state.
                valid = (chunk * t_chunk + t) < t_actual
                c_new = jnp.where(valid, c_new, c_prev)
                h_new = jnp.where(valid, h_new, h_prev)
            return h_new, c_new

        h0 = h_ref[...]
        c0 = c_ref[...]
        h_fin, c_fin = lax.fori_loop(0, t_chunk, step, (h0, c0), unroll=True)
        h_ref[...] = h_fin
        c_ref[...] = c_fin

    return kernel


def _pack_lstm_weights(w_ih, w_hh, b_ih, b_hh, H, Hp):
    """Re-layout PyTorch LSTM weights so every gate occupies its own
    lane-aligned Hp-wide column block and the matmuls are plain row-major
    (x @ Wih_t, h @ Whh_t).  Padded rows/columns are zero."""
    E = w_ih.shape[1]
    pad = Hp - H

    wih_g = jnp.transpose(w_ih.reshape(4, H, E), (0, 2, 1))      # (4, E, H)
    wih_g = jnp.pad(wih_g, ((0, 0), (0, 0), (0, pad)))           # (4, E, Hp)
    wih_t = jnp.transpose(wih_g, (1, 0, 2)).reshape(E, 4 * Hp)   # (E, 4Hp)

    whh_g = jnp.transpose(w_hh.reshape(4, H, H), (0, 2, 1))      # (4, Hin, Hout)
    whh_g = jnp.pad(whh_g, ((0, 0), (0, pad), (0, pad)))         # (4, Hp, Hp)
    whh_t = jnp.transpose(whh_g, (1, 0, 2)).reshape(Hp, 4 * Hp)  # (Hp, 4Hp)

    bias = jnp.pad((b_ih + b_hh).reshape(4, H), ((0, 0), (0, pad)))
    bias = bias.reshape(1, 4 * Hp)                               # (1, 4Hp)
    return wih_t, whh_t, bias


def encoder_forward(x_ids, params, *, time_chunk=16):
    """x_ids: (B, T) int32 token ids.  Returns (hidden_state, cell_state),
    each of shape (1, B, H) -- matching PyTorch nn.LSTM(batch_first=True)."""
    emb = params["embedding"]          # (V, E), row 0 zero (padding_idx=0)
    w_ih = params["w_ih"]              # (4H, E)  PyTorch layout
    w_hh = params["w_hh"]              # (4H, H)
    b_ih = params["b_ih"]              # (4H,)
    b_hh = params["b_hh"]              # (4H,)

    B, T = x_ids.shape
    V, E = emb.shape
    H = w_hh.shape[1]

    if T == 0:  # degenerate input: return zero state rather than garbage
        z = jnp.zeros((1, B, H), jnp.float32)
        return z, z

    Hp = _round_up(H, LANE)            # per-gate lane alignment
    Bp = _round_up(B, SUBLANE)         # sublane alignment
    Tc = min(T, time_chunk)            # timesteps per grid step
    Tp = _round_up(T, Tc)
    n_chunks = Tp // Tc

    wih_t, whh_t, bias = _pack_lstm_weights(w_ih, w_hh, b_ih, b_hh, H, Hp)
    whh_bf16 = whh_t.astype(jnp.bfloat16)   # MXU operand; f32 accumulate

    # ---- glue: hoisted input projection, time-major, padded (Tp, Bp, 4Hp) ----
    ids_tm = jnp.zeros((Tp, Bp), x_ids.dtype).at[:T, :B].set(x_ids.T)
    if V <= 4096:
        # Small vocab: fold embedding + bias into a (V, 4Hp) gate table and
        # gather pre-activations directly (no (T,B,E) tensor, no transpose,
        # no per-token projection matmul).
        gate_table = jnp.dot(emb, wih_t,
                             preferred_element_type=jnp.float32) + bias
        gates_x = jnp.take(gate_table, ids_tm, axis=0)           # (Tp, Bp, 4Hp)
    else:
        x_emb = jnp.take(emb, ids_tm, axis=0)                    # (Tp, Bp, E)
        gates_x = (jnp.dot(x_emb.reshape(Tp * Bp, E), wih_t,
                           preferred_element_type=jnp.float32) + bias
                   ).reshape(Tp, Bp, 4 * Hp)

    kernel = _make_lstm_kernel(t_actual=T, t_chunk=Tc, needs_mask=(Tp != T))

    grid_spec = pltpu.PrefetchScalarGridSpec(
        num_scalar_prefetch=0,
        grid=(n_chunks,),
        in_specs=[
            pl.BlockSpec((Tc, Bp, 4 * Hp), lambda c: (c, 0, 0)),  # gates_x chunk
            pl.BlockSpec((Hp, 4 * Hp), lambda c: (0, 0)),         # whh, resident
        ],
        out_specs=[
            pl.BlockSpec((Bp, Hp), lambda c: (0, 0)),             # h (resident)
            pl.BlockSpec((Bp, Hp), lambda c: (0, 0)),             # c (resident)
        ],
    )

    h_pad, c_pad = pl.pallas_call(
        kernel,
        out_shape=(
            jax.ShapeDtypeStruct((Bp, Hp), jnp.float32),
            jax.ShapeDtypeStruct((Bp, Hp), jnp.float32),
        ),
        grid_spec=grid_spec,
        compiler_params=pltpu.CompilerParams(
            dimension_semantics=("arbitrary",),    # recurrence: must be serial
            vmem_limit_bytes=32 * 1024 * 1024,
        ),
    )(gates_x, whh_bf16)

    # Strip batch/hidden padding; PyTorch returns (num_layers, batch, hidden).
    h_n = h_pad[:B, :H][None, :, :]
    c_n = c_pad[:B, :H][None, :, :]
    return h_n, c_n


def init_params(key, vocab_size, embedding_dim, hidden_units):
    k_emb, k_wih, k_whh, k_bih, k_bhh = jax.random.split(key, 5)
    emb = jax.random.normal(k_emb, (vocab_size, embedding_dim), jnp.float32)
    emb = emb.at[0].set(0.0)                         # padding_idx=0
    bound = 1.0 / jnp.sqrt(hidden_units)
    w_ih = jax.random.uniform(k_wih, (4 * hidden_units, embedding_dim),
                              jnp.float32, -bound, bound)
    w_hh = jax.random.uniform(k_whh, (4 * hidden_units, hidden_units),
                              jnp.float32, -bound, bound)
    b_ih = jax.random.uniform(k_bih, (4 * hidden_units,), jnp.float32,
                              -bound, bound)
    b_hh = jax.random.uniform(k_bhh, (4 * hidden_units,), jnp.float32,
                              -bound, bound)
    return {"embedding": emb, "w_ih": w_ih, "w_hh": w_hh,
            "b_ih": b_ih, "b_hh": b_hh}


def encoder_reference(x_ids, params):
    """Pure-JAX f32 reference matching PyTorch nn.LSTM forward semantics."""
    emb = params["embedding"]
    w_ih, w_hh = params["w_ih"], params["w_hh"]
    b = params["b_ih"] + params["b_hh"]
    B, T = x_ids.shape
    H = w_hh.shape[1]
    x = jnp.take(emb, x_ids, axis=0)                 # (B, T, E)
    h = jnp.zeros((B, H), jnp.float32)
    c = jnp.zeros((B, H), jnp.float32)
    for t in range(T):
        gates = x[:, t, :] @ w_ih.T + h @ w_hh.T + b
        i_g = jax.nn.sigmoid(gates[:, 0 * H:1 * H])
        f_g = jax.nn.sigmoid(gates[:, 1 * H:2 * H])
        g_g = jnp.tanh(gates[:, 2 * H:3 * H])
        o_g = jax.nn.sigmoid(gates[:, 3 * H:4 * H])
        c = f_g * c + i_g * g_g
        h = o_g * jnp.tanh(c)
    return h[None], c[None]


if __name__ == "__main__":
    VOCAB = 20
    EMBED = 16
    HIDDEN = 32
    BATCH = 2
    SEQ = 8

    key = jax.random.PRNGKey(0)
    k_params, k_ids = jax.random.split(key)
    params = init_params(k_params, VOCAB, EMBED, HIDDEN)

    # token ids in [0, VOCAB); include some padding zeros
    x_ids = jax.random.randint(k_ids, (BATCH, SEQ), 0, VOCAB, dtype=jnp.int32)
    x_ids = x_ids.at[:, -1].set(0)

    hidden_state, cell_state = encoder_forward(x_ids, params)
    jax.block_until_ready((hidden_state, cell_state))

    assert hidden_state.shape == (1, BATCH, HIDDEN)
    assert cell_state.shape == (1, BATCH, HIDDEN)

    # Numerical sanity vs f32 reference (bf16 W_hh on the MXU => loose tol).
    h_ref, c_ref = encoder_reference(x_ids, params)
    assert float(jnp.max(jnp.abs(hidden_state - h_ref))) < 0.1
    assert float(jnp.max(jnp.abs(cell_state - c_ref))) < 0.1

    print("KERNEL_OK")
</pallas_src>

<mosaic_0001>
module attributes {stable_mosaic.version = 11 : i64} {
  func.func @kernel(%arg0: i32, %arg1: memref<8x8x512xf32, #tpu.memory_space<vmem>>, %arg2: memref<128x512xbf16, #tpu.memory_space<vmem>>, %arg3: memref<8x128xf32, #tpu.memory_space<vmem>>, %arg4: memref<8x128xf32, #tpu.memory_space<vmem>>) attributes {dimension_semantics = [#tpu.dimension_semantics<arbitrary>], iteration_bounds = array<i64: 1>, scalar_prefetch = 0 : i64, scratch_operands = 0 : i64, tpu.core_type = #tpu.core_type<tc>, window_params = [{transform_indices = @transform_0, window_bounds = array<i64: 8, 8, 512>}, {pipeline_mode = #tpu.pipeline_mode<synchronous>, transform_indices = @transform_1, window_bounds = array<i64: 128, 512>}, {pipeline_mode = #tpu.pipeline_mode<synchronous>, transform_indices = @transform_2, window_bounds = array<i64: 8, 128>}, {pipeline_mode = #tpu.pipeline_mode<synchronous>, transform_indices = @transform_3, window_bounds = array<i64: 8, 128>}]} {
    %c0_i32 = arith.constant 0 : i32
    %0 = arith.cmpi eq, %arg0, %c0_i32 : i32
    %1 = arith.extui %0 : i1 to i32
    %c0_i32_0 = arith.constant 0 : i32
    %2 = arith.cmpi ne, %1, %c0_i32_0 : i32
    scf.if %2 {
      %cst_58 = arith.constant 0.000000e+00 : f32
      %256 = vector.broadcast %cst_58 : f32 to vector<8x128xf32>
      %c0_59 = arith.constant 0 : index
      %c0_60 = arith.constant 0 : index
      %257 = vector.load %arg3[%c0_59, %c0_60] : memref<8x128xf32, #tpu.memory_space<vmem>>, vector<8x128xf32>
      tpu.vector_store %arg3[%c0_59, %c0_60], %256 {strides = array<i32>} : memref<8x128xf32, #tpu.memory_space<vmem>>, vector<8x128xf32>,
      %cst_61 = arith.constant 0.000000e+00 : f32
      %258 = vector.broadcast %cst_61 : f32 to vector<8x128xf32>
      %c0_62 = arith.constant 0 : index
      %c0_63 = arith.constant 0 : index
      %259 = vector.load %arg4[%c0_62, %c0_63] : memref<8x128xf32, #tpu.memory_space<vmem>>, vector<8x128xf32>
      tpu.vector_store %arg4[%c0_62, %c0_63], %258 {strides = array<i32>} : memref<8x128xf32, #tpu.memory_space<vmem>>, vector<8x128xf32>,
    } else {
    }
    %c0 = arith.constant 0 : index
    %c0_1 = arith.constant 0 : index
    %3 = vector.load %arg2[%c0, %c0_1] : memref<128x512xbf16, #tpu.memory_space<vmem>>, vector<128x512xbf16>
    %c0_2 = arith.constant 0 : index
    %c0_3 = arith.constant 0 : index
    %4 = vector.load %arg3[%c0_2, %c0_3] : memref<8x128xf32, #tpu.memory_space<vmem>>, vector<8x128xf32>
    %c0_4 = arith.constant 0 : index
    %c0_5 = arith.constant 0 : index
    %5 = vector.load %arg4[%c0_4, %c0_5] : memref<8x128xf32, #tpu.memory_space<vmem>>, vector<8x128xf32>
    %c0_i32_6 = arith.constant 0 : i32
    %6 = arith.index_cast %c0_i32_6 : i32 to index
    %c0_7 = arith.constant 0 : index
    %c0_8 = arith.constant 0 : index
    %7 = vector.load %arg1[%6, %c0_7, %c0_8] : memref<8x8x512xf32, #tpu.memory_space<vmem>>, vector<1x8x512xf32>
    %8 = vector.shape_cast %7 : vector<1x8x512xf32> to vector<8x512xf32>
    %9 = arith.truncf %4 : vector<8x128xf32> to vector<8x128xbf16>
    %cst = arith.constant dense<0.000000e+00> : vector<8x512xf32>
    %10 = tpu.matmul %9, %3, %cst {dimension_numbers = #tpu.dot_dimension_numbers<[1], [0], [0], [1], [0, 0, 1, 1], [], []>} : vector<8x128xbf16>, vector<128x512xbf16>, vector<8x512xf32> -> vector<8x512xf32>
    %11 = arith.addf %8, %10 : vector<8x512xf32>
    %12 = vector.extract_strided_slice %11 {offsets = [0, 0], sizes = [8, 128], strides = [1, 1]} : vector<8x512xf32> to vector<8x128xf32>
    %13 = arith.negf %12 : vector<8x128xf32>
    %14 = math.exp %13 : vector<8x128xf32>
    %cst_9 = arith.constant 1.000000e+00 : f32
    %15 = vector.broadcast %cst_9 : f32 to vector<8x128xf32>
    %16 = arith.addf %15, %14 : vector<8x128xf32>
    %17 = arith.divf %15, %16 : vector<8x128xf32>
    %18 = vector.extract_strided_slice %11 {offsets = [0, 128], sizes = [8, 128], strides = [1, 1]} : vector<8x512xf32> to vector<8x128xf32>
    %19 = arith.negf %18 : vector<8x128xf32>
    %20 = math.exp %19 : vector<8x128xf32>
    %cst_10 = arith.constant 1.000000e+00 : f32
    %21 = vector.broadcast %cst_10 : f32 to vector<8x128xf32>
    %22 = arith.addf %21, %20 : vector<8x128xf32>
    %23 = arith.divf %21, %22 : vector<8x128xf32>
    %24 = vector.extract_strided_slice %11 {offsets = [0, 256], sizes = [8, 128], strides = [1, 1]} : vector<8x512xf32> to vector<8x128xf32>
    %25 = math.tanh %24 : vector<8x128xf32>
    %26 = vector.extract_strided_slice %11 {offsets = [0, 384], sizes = [8, 128], strides = [1, 1]} : vector<8x512xf32> to vector<8x128xf32>
    %27 = arith.negf %26 : vector<8x128xf32>
    %28 = math.exp %27 : vector<8x128xf32>
    %cst_11 = arith.constant 1.000000e+00 : f32
    %29 = vector.broadcast %cst_11 : f32 to vector<8x128xf32>
    %30 = arith.addf %29, %28 : vector<8x128xf32>
    %31 = arith.divf %29, %30 : vector<8x128xf32>
    %32 = arith.mulf %23, %5 : vector<8x128xf32>
    %33 = arith.mulf %17, %25 : vector<8x128xf32>
    %34 = arith.addf %32, %33 : vector<8x128xf32>
    %35 = math.tanh %34 : vector<8x128xf32>
    %36 = arith.mulf %31, %35 : vector<8x128xf32>
    %c1_i32 = arith.constant 1 : i32
    %37 = arith.index_cast %c1_i32 : i32 to index
    %c0_12 = arith.constant 0 : index
    %c0_13 = arith.constant 0 : index
    %38 = vector.load %arg1[%37, %c0_12, %c0_13] : memref<8x8x512xf32, #tpu.memory_space<vmem>>, vector<1x8x512xf32>
    %39 = vector.shape_cast %38 : vector<1x8x512xf32> to vector<8x512xf32>
    %40 = arith.truncf %36 : vector<8x128xf32> to vector<8x128xbf16>
    %cst_14 = arith.constant dense<0.000000e+00> : vector<8x512xf32>
    %41 = tpu.matmul %40, %3, %cst_14 {dimension_numbers = #tpu.dot_dimension_numbers<[1], [0], [0], [1], [0, 0, 1, 1], [], []>} : vector<8x128xbf16>, vector<128x512xbf16>, vector<8x512xf32> -> vector<8x512xf32>
    %42 = arith.addf %39, %41 : vector<8x512xf32>
    %43 = vector.extract_strided_slice %42 {offsets = [0, 0], sizes = [8, 128], strides = [1, 1]} : vector<8x512xf32> to vector<8x128xf32>
    %44 = arith.negf %43 : vector<8x128xf32>
    %45 = math.exp %44 : vector<8x128xf32>
    %cst_15 = arith.constant 1.000000e+00 : f32
    %46 = vector.broadcast %cst_15 : f32 to vector<8x128xf32>
    %47 = arith.addf %46, %45 : vector<8x128xf32>
    %48 = arith.divf %46, %47 : vector<8x128xf32>
    %49 = vector.extract_strided_slice %42 {offsets = [0, 128], sizes = [8, 128], strides = [1, 1]} : vector<8x512xf32> to vector<8x128xf32>
    %50 = arith.negf %49 : vector<8x128xf32>
    %51 = math.exp %50 : vector<8x128xf32>
    %cst_16 = arith.constant 1.000000e+00 : f32
    %52 = vector.broadcast %cst_16 : f32 to vector<8x128xf32>
    %53 = arith.addf %52, %51 : vector<8x128xf32>
    %54 = arith.divf %52, %53 : vector<8x128xf32>
    %55 = vector.extract_strided_slice %42 {offsets = [0, 256], sizes = [8, 128], strides = [1, 1]} : vector<8x512xf32> to vector<8x128xf32>
    %56 = math.tanh %55 : vector<8x128xf32>
    %57 = vector.extract_strided_slice %42 {offsets = [0, 384], sizes = [8, 128], strides = [1, 1]} : vector<8x512xf32> to vector<8x128xf32>
    %58 = arith.negf %57 : vector<8x128xf32>
    %59 = math.exp %58 : vector<8x128xf32>
    %cst_17 = arith.constant 1.000000e+00 : f32
    %60 = vector.broadcast %cst_17 : f32 to vector<8x128xf32>
    %61 = arith.addf %60, %59 : vector<8x128xf32>
    %62 = arith.divf %60, %61 : vector<8x128xf32>
    %63 = arith.mulf %54, %34 : vector<8x128xf32>
    %64 = arith.mulf %48, %56 : vector<8x128xf32>
    %65 = arith.addf %63, %64 : vector<8x128xf32>
    %66 = math.tanh %65 : vector<8x128xf32>
    %67 = arith.mulf %62, %66 : vector<8x128xf32>
    %c2_i32 = arith.constant 2 : i32
    %68 = arith.index_cast %c2_i32 : i32 to index
    %c0_18 = arith.constant 0 : index
    %c0_19 = arith.constant 0 : index
    %69 = vector.load %arg1[%68, %c0_18, %c0_19] : memref<8x8x512xf32, #tpu.memory_space<vmem>>, vector<1x8x512xf32>
    %70 = vector.shape_cast %69 : vector<1x8x512xf32> to vector<8x512xf32>
    %71 = arith.truncf %67 : vector<8x128xf32> to vector<8x128xbf16>
    %cst_20 = arith.constant dense<0.000000e+00> : vector<8x512xf32>
    %72 = tpu.matmul %71, %3, %cst_20 {dimension_numbers = #tpu.dot_dimension_numbers<[1], [0], [0], [1], [0, 0, 1, 1], [], []>} : vector<8x128xbf16>, vector<128x512xbf16>, vector<8x512xf32> -> vector<8x512xf32>
    %73 = arith.addf %70, %72 : vector<8x512xf32>
    %74 = vector.extract_strided_slice %73 {offsets = [0, 0], sizes = [8, 128], strides = [1, 1]} : vector<8x512xf32> to vector<8x128xf32>
    %75 = arith.negf %74 : vector<8x128xf32>
    %76 = math.exp %75 : vector<8x128xf32>
    %cst_21 = arith.constant 1.000000e+00 : f32
    %77 = vector.broadcast %cst_21 : f32 to vector<8x128xf32>
    %78 = arith.addf %77, %76 : vector<8x128xf32>
    %79 = arith.divf %77, %78 : vector<8x128xf32>
    %80 = vector.extract_strided_slice %73 {offsets = [0, 128], sizes = [8, 128], strides = [1, 1]} : vector<8x512xf32> to vector<8x128xf32>
    %81 = arith.negf %80 : vector<8x128xf32>
    %82 = math.exp %81 : vector<8x128xf32>
    %cst_22 = arith.constant 1.000000e+00 : f32
    %83 = vector.broadcast %cst_22 : f32 to vector<8x128xf32>
    %84 = arith.addf %83, %82 : vector<8x128xf32>
    %85 = arith.divf %83, %84 : vector<8x128xf32>
    %86 = vector.extract_strided_slice %73 {offsets = [0, 256], sizes = [8, 128], strides = [1, 1]} : vector<8x512xf32> to vector<8x128xf32>
    %87 = math.tanh %86 : vector<8x128xf32>
    %88 = vector.extract_strided_slice %73 {offsets = [0, 384], sizes = [8, 128], strides = [1, 1]} : vector<8x512xf32> to vector<8x128xf32>
    %89 = arith.negf %88 : vector<8x128xf32>
    %90 = math.exp %89 : vector<8x128xf32>
    %cst_23 = arith.constant 1.000000e+00 : f32
    %91 = vector.broadcast %cst_23 : f32 to vector<8x128xf32>
    %92 = arith.addf %91, %90 : vector<8x128xf32>
    %93 = arith.divf %91, %92 : vector<8x128xf32>
    %94 = arith.mulf %85, %65 : vector<8x128xf32>
    %95 = arith.mulf %79, %87 : vector<8x128xf32>
    %96 = arith.addf %94, %95 : vector<8x128xf32>
    %97 = math.tanh %96 : vector<8x128xf32>
    %98 = arith.mulf %93, %97 : vector<8x128xf32>
    %c3_i32 = arith.constant 3 : i32
    %99 = arith.index_cast %c3_i32 : i32 to index
    %c0_24 = arith.constant 0 : index
    %c0_25 = arith.constant 0 : index
    %100 = vector.load %arg1[%99, %c0_24, %c0_25] : memref<8x8x512xf32, #tpu.memory_space<vmem>>, vector<1x8x512xf32>
    %101 = vector.shape_cast %100 : vector<1x8x512xf32> to vector<8x512xf32>
    %102 = arith.truncf %98 : vector<8x128xf32> to vector<8x128xbf16>
    %cst_26 = arith.constant dense<0.000000e+00> : vector<8x512xf32>
    %103 = tpu.matmul %102, %3, %cst_26 {dimension_numbers = #tpu.dot_dimension_numbers<[1], [0], [0], [1], [0, 0, 1, 1], [], []>} : vector<8x128xbf16>, vector<128x512xbf16>, vector<8x512xf32> -> vector<8x512xf32>
    %104 = arith.addf %101, %103 : vector<8x512xf32>
    %105 = vector.extract_strided_slice %104 {offsets = [0, 0], sizes = [8, 128], strides = [1, 1]} : vector<8x512xf32> to vector<8x128xf32>
    %106 = arith.negf %105 : vector<8x128xf32>
    %107 = math.exp %106 : vector<8x128xf32>
    %cst_27 = arith.constant 1.000000e+00 : f32
    %108 = vector.broadcast %cst_27 : f32 to vector<8x128xf32>
    %109 = arith.addf %108, %107 : vector<8x128xf32>
    %110 = arith.divf %108, %109 : vector<8x128xf32>
    %111 = vector.extract_strided_slice %104 {offsets = [0, 128], sizes = [8, 128], strides = [1, 1]} : vector<8x512xf32> to vector<8x128xf32>
    %112 = arith.negf %111 : vector<8x128xf32>
    %113 = math.exp %112 : vector<8x128xf32>
    %cst_28 = arith.constant 1.000000e+00 : f32
    %114 = vector.broadcast %cst_28 : f32 to vector<8x128xf32>
    %115 = arith.addf %114, %113 : vector<8x128xf32>
    %116 = arith.divf %114, %115 : vector<8x128xf32>
    %117 = vector.extract_strided_slice %104 {offsets = [0, 256], sizes = [8, 128], strides = [1, 1]} : vector<8x512xf32> to vector<8x128xf32>
    %118 = math.tanh %117 : vector<8x128xf32>
    %119 = vector.extract_strided_slice %104 {offsets = [0, 384], sizes = [8, 128], strides = [1, 1]} : vector<8x512xf32> to vector<8x128xf32>
    %120 = arith.negf %119 : vector<8x128xf32>
    %121 = math.exp %120 : vector<8x128xf32>
    %cst_29 = arith.constant 1.000000e+00 : f32
    %122 = vector.broadcast %cst_29 : f32 to vector<8x128xf32>
    %123 = arith.addf %122, %121 : vector<8x128xf32>
    %124 = arith.divf %122, %123 : vector<8x128xf32>
    %125 = arith.mulf %116, %96 : vector<8x128xf32>
    %126 = arith.mulf %110, %118 : vector<8x128xf32>
    %127 = arith.addf %125, %126 : vector<8x128xf32>
    %128 = math.tanh %127 : vector<8x128xf32>
    %129 = arith.mulf %124, %128 : vector<8x128xf32>
    %c4_i32 = arith.constant 4 : i32
    %130 = arith.index_cast %c4_i32 : i32 to index
    %c0_30 = arith.constant 0 : index
    %c0_31 = arith.constant 0 : index
    %131 = vector.load %arg1[%130, %c0_30, %c0_31] : memref<8x8x512xf32, #tpu.memory_space<vmem>>, vector<1x8x512xf32>
    %132 = vector.shape_cast %131 : vector<1x8x512xf32> to vector<8x512xf32>
    %133 = arith.truncf %129 : vector<8x128xf32> to vector<8x128xbf16>
    %cst_32 = arith.constant dense<0.000000e+00> : vector<8x512xf32>
    %134 = tpu.matmul %133, %3, %cst_32 {dimension_numbers = #tpu.dot_dimension_numbers<[1], [0], [0], [1], [0, 0, 1, 1], [], []>} : vector<8x128xbf16>, vector<128x512xbf16>, vector<8x512xf32> -> vector<8x512xf32>
    %135 = arith.addf %132, %134 : vector<8x512xf32>
    %136 = vector.extract_strided_slice %135 {offsets = [0, 0], sizes = [8, 128], strides = [1, 1]} : vector<8x512xf32> to vector<8x128xf32>
    %137 = arith.negf %136 : vector<8x128xf32>
    %138 = math.exp %137 : vector<8x128xf32>
    %cst_33 = arith.constant 1.000000e+00 : f32
    %139 = vector.broadcast %cst_33 : f32 to vector<8x128xf32>
    %140 = arith.addf %139, %138 : vector<8x128xf32>
    %141 = arith.divf %139, %140 : vector<8x128xf32>
    %142 = vector.extract_strided_slice %135 {offsets = [0, 128], sizes = [8, 128], strides = [1, 1]} : vector<8x512xf32> to vector<8x128xf32>
    %143 = arith.negf %142 : vector<8x128xf32>
    %144 = math.exp %143 : vector<8x128xf32>
    %cst_34 = arith.constant 1.000000e+00 : f32
    %145 = vector.broadcast %cst_34 : f32 to vector<8x128xf32>
    %146 = arith.addf %145, %144 : vector<8x128xf32>
    %147 = arith.divf %145, %146 : vector<8x128xf32>
    %148 = vector.extract_strided_slice %135 {offsets = [0, 256], sizes = [8, 128], strides = [1, 1]} : vector<8x512xf32> to vector<8x128xf32>
    %149 = math.tanh %148 : vector<8x128xf32>
    %150 = vector.extract_strided_slice %135 {offsets = [0, 384], sizes = [8, 128], strides = [1, 1]} : vector<8x512xf32> to vector<8x128xf32>
    %151 = arith.negf %150 : vector<8x128xf32>
    %152 = math.exp %151 : vector<8x128xf32>
    %cst_35 = arith.constant 1.000000e+00 : f32
    %153 = vector.broadcast %cst_35 : f32 to vector<8x128xf32>
    %154 = arith.addf %153, %152 : vector<8x128xf32>
    %155 = arith.divf %153, %154 : vector<8x128xf32>
    %156 = arith.mulf %147, %127 : vector<8x128xf32>
    %157 = arith.mulf %141, %149 : vector<8x128xf32>
    %158 = arith.addf %156, %157 : vector<8x128xf32>
    %159 = math.tanh %158 : vector<8x128xf32>
    %160 = arith.mulf %155, %159 : vector<8x128xf32>
    %c5_i32 = arith.constant 5 : i32
    %161 = arith.index_cast %c5_i32 : i32 to index
    %c0_36 = arith.constant 0 : index
    %c0_37 = arith.constant 0 : index
    %162 = vector.load %arg1[%161, %c0_36, %c0_37] : memref<8x8x512xf32, #tpu.memory_space<vmem>>, vector<1x8x512xf32>
    %163 = vector.shape_cast %162 : vector<1x8x512xf32> to vector<8x512xf32>
    %164 = arith.truncf %160 : vector<8x128xf32> to vector<8x128xbf16>
    %cst_38 = arith.constant dense<0.000000e+00> : vector<8x512xf32>
    %165 = tpu.matmul %164, %3, %cst_38 {dimension_numbers = #tpu.dot_dimension_numbers<[1], [0], [0], [1], [0, 0, 1, 1], [], []>} : vector<8x128xbf16>, vector<128x512xbf16>, vector<8x512xf32> -> vector<8x512xf32>
    %166 = arith.addf %163, %165 : vector<8x512xf32>
    %167 = vector.extract_strided_slice %166 {offsets = [0, 0], sizes = [8, 128], strides = [1, 1]} : vector<8x512xf32> to vector<8x128xf32>
    %168 = arith.negf %167 : vector<8x128xf32>
    %169 = math.exp %168 : vector<8x128xf32>
    %cst_39 = arith.constant 1.000000e+00 : f32
    %170 = vector.broadcast %cst_39 : f32 to vector<8x128xf32>
    %171 = arith.addf %170, %169 : vector<8x128xf32>
    %172 = arith.divf %170, %171 : vector<8x128xf32>
    %173 = vector.extract_strided_slice %166 {offsets = [0, 128], sizes = [8, 128], strides = [1, 1]} : vector<8x512xf32> to vector<8x128xf32>
    %174 = arith.negf %173 : vector<8x128xf32>
    %175 = math.exp %174 : vector<8x128xf32>
    %cst_40 = arith.constant 1.000000e+00 : f32
    %176 = vector.broadcast %cst_40 : f32 to vector<8x128xf32>
    %177 = arith.addf %176, %175 : vector<8x128xf32>
    %178 = arith.divf %176, %177 : vector<8x128xf32>
    %179 = vector.extract_strided_slice %166 {offsets = [0, 256], sizes = [8, 128], strides = [1, 1]} : vector<8x512xf32> to vector<8x128xf32>
    %180 = math.tanh %179 : vector<8x128xf32>
    %181 = vector.extract_strided_slice %166 {offsets = [0, 384], sizes = [8, 128], strides = [1, 1]} : vector<8x512xf32> to vector<8x128xf32>
    %182 = arith.negf %181 : vector<8x128xf32>
    %183 = math.exp %182 : vector<8x128xf32>
    %cst_41 = arith.constant 1.000000e+00 : f32
    %184 = vector.broadcast %cst_41 : f32 to vector<8x128xf32>
    %185 = arith.addf %184, %183 : vector<8x128xf32>
    %186 = arith.divf %184, %185 : vector<8x128xf32>
    %187 = arith.mulf %178, %158 : vector<8x128xf32>
    %188 = arith.mulf %172, %180 : vector<8x128xf32>
    %189 = arith.addf %187, %188 : vector<8x128xf32>
    %190 = math.tanh %189 : vector<8x128xf32>
    %191 = arith.mulf %186, %190 : vector<8x128xf32>
    %c6_i32 = arith.constant 6 : i32
    %192 = arith.index_cast %c6_i32 : i32 to index
    %c0_42 = arith.constant 0 : index
    %c0_43 = arith.constant 0 : index
    %193 = vector.load %arg1[%192, %c0_42, %c0_43] : memref<8x8x512xf32, #tpu.memory_space<vmem>>, vector<1x8x512xf32>
    %194 = vector.shape_cast %193 : vector<1x8x512xf32> to vector<8x512xf32>
    %195 = arith.truncf %191 : vector<8x128xf32> to vector<8x128xbf16>
    %cst_44 = arith.constant dense<0.000000e+00> : vector<8x512xf32>
    %196 = tpu.matmul %195, %3, %cst_44 {dimension_numbers = #tpu.dot_dimension_numbers<[1], [0], [0], [1], [0, 0, 1, 1], [], []>} : vector<8x128xbf16>, vector<128x512xbf16>, vector<8x512xf32> -> vector<8x512xf32>
    %197 = arith.addf %194, %196 : vector<8x512xf32>
    %198 = vector.extract_strided_slice %197 {offsets = [0, 0], sizes = [8, 128], strides = [1, 1]} : vector<8x512xf32> to vector<8x128xf32>
    %199 = arith.negf %198 : vector<8x128xf32>
    %200 = math.exp %199 : vector<8x128xf32>
    %cst_45 = arith.constant 1.000000e+00 : f32
    %201 = vector.broadcast %cst_45 : f32 to vector<8x128xf32>
    %202 = arith.addf %201, %200 : vector<8x128xf32>
    %203 = arith.divf %201, %202 : vector<8x128xf32>
    %204 = vector.extract_strided_slice %197 {offsets = [0, 128], sizes = [8, 128], strides = [1, 1]} : vector<8x512xf32> to vector<8x128xf32>
    %205 = arith.negf %204 : vector<8x128xf32>
    %206 = math.exp %205 : vector<8x128xf32>
    %cst_46 = arith.constant 1.000000e+00 : f32
    %207 = vector.broadcast %cst_46 : f32 to vector<8x128xf32>
    %208 = arith.addf %207, %206 : vector<8x128xf32>
    %209 = arith.divf %207, %208 : vector<8x128xf32>
    %210 = vector.extract_strided_slice %197 {offsets = [0, 256], sizes = [8, 128], strides = [1, 1]} : vector<8x512xf32> to vector<8x128xf32>
    %211 = math.tanh %210 : vector<8x128xf32>
    %212 = vector.extract_strided_slice %197 {offsets = [0, 384], sizes = [8, 128], strides = [1, 1]} : vector<8x512xf32> to vector<8x128xf32>
    %213 = arith.negf %212 : vector<8x128xf32>
    %214 = math.exp %213 : vector<8x128xf32>
    %cst_47 = arith.constant 1.000000e+00 : f32
    %215 = vector.broadcast %cst_47 : f32 to vector<8x128xf32>
    %216 = arith.addf %215, %214 : vector<8x128xf32>
    %217 = arith.divf %215, %216 : vector<8x128xf32>
    %218 = arith.mulf %209, %189 : vector<8x128xf32>
    %219 = arith.mulf %203, %211 : vector<8x128xf32>
    %220 = arith.addf %218, %219 : vector<8x128xf32>
    %221 = math.tanh %220 : vector<8x128xf32>
    %222 = arith.mulf %217, %221 : vector<8x128xf32>
    %c7_i32 = arith.constant 7 : i32
    %223 = arith.index_cast %c7_i32 : i32 to index
    %c0_48 = arith.constant 0 : index
    %c0_49 = arith.constant 0 : index
    %224 = vector.load %arg1[%223, %c0_48, %c0_49] : memref<8x8x512xf32, #tpu.memory_space<vmem>>, vector<1x8x512xf32>
    %225 = vector.shape_cast %224 : vector<1x8x512xf32> to vector<8x512xf32>
    %226 = arith.truncf %222 : vector<8x128xf32> to vector<8x128xbf16>
    %cst_50 = arith.constant dense<0.000000e+00> : vector<8x512xf32>
    %227 = tpu.matmul %226, %3, %cst_50 {dimension_numbers = #tpu.dot_dimension_numbers<[1], [0], [0], [1], [0, 0, 1, 1], [], []>} : vector<8x128xbf16>, vector<128x512xbf16>, vector<8x512xf32> -> vector<8x512xf32>
    %228 = arith.addf %225, %227 : vector<8x512xf32>
    %229 = vector.extract_strided_slice %228 {offsets = [0, 0], sizes = [8, 128], strides = [1, 1]} : vector<8x512xf32> to vector<8x128xf32>
    %230 = arith.negf %229 : vector<8x128xf32>
    %231 = math.exp %230 : vector<8x128xf32>
    %cst_51 = arith.constant 1.000000e+00 : f32
    %232 = vector.broadcast %cst_51 : f32 to vector<8x128xf32>
    %233 = arith.addf %232, %231 : vector<8x128xf32>
    %234 = arith.divf %232, %233 : vector<8x128xf32>
    %235 = vector.extract_strided_slice %228 {offsets = [0, 128], sizes = [8, 128], strides = [1, 1]} : vector<8x512xf32> to vector<8x128xf32>
    %236 = arith.negf %235 : vector<8x128xf32>
    %237 = math.exp %236 : vector<8x128xf32>
    %cst_52 = arith.constant 1.000000e+00 : f32
    %238 = vector.broadcast %cst_52 : f32 to vector<8x128xf32>
    %239 = arith.addf %238, %237 : vector<8x128xf32>
    %240 = arith.divf %238, %239 : vector<8x128xf32>
    %241 = vector.extract_strided_slice %228 {offsets = [0, 256], sizes = [8, 128], strides = [1, 1]} : vector<8x512xf32> to vector<8x128xf32>
    %242 = math.tanh %241 : vector<8x128xf32>
    %243 = vector.extract_strided_slice %228 {offsets = [0, 384], sizes = [8, 128], strides = [1, 1]} : vector<8x512xf32> to vector<8x128xf32>
    %244 = arith.negf %243 : vector<8x128xf32>
    %245 = math.exp %244 : vector<8x128xf32>
    %cst_53 = arith.constant 1.000000e+00 : f32
    %246 = vector.broadcast %cst_53 : f32 to vector<8x128xf32>
    %247 = arith.addf %246, %245 : vector<8x128xf32>
    %248 = arith.divf %246, %247 : vector<8x128xf32>
    %249 = arith.mulf %240, %220 : vector<8x128xf32>
    %250 = arith.mulf %234, %242 : vector<8x128xf32>
    %251 = arith.addf %249, %250 : vector<8x128xf32>
    %252 = math.tanh %251 : vector<8x128xf32>
    %253 = arith.mulf %248, %252 : vector<8x128xf32>
    %c8_i32 = arith.constant 8 : i32
    %c0_54 = arith.constant 0 : index
    %c0_55 = arith.constant 0 : index
    %254 = vector.load %arg3[%c0_54, %c0_55] : memref<8x128xf32, #tpu.memory_space<vmem>>, vector<8x128xf32>
    tpu.vector_store %arg3[%c0_54, %c0_55], %253 {strides = array<i32>} : memref<8x128xf32, #tpu.memory_space<vmem>>, vector<8x128xf32>,
    %c0_56 = arith.constant 0 : index
    %c0_57 = arith.constant 0 : index
    %255 = vector.load %arg4[%c0_56, %c0_57] : memref<8x128xf32, #tpu.memory_space<vmem>>, vector<8x128xf32>
    tpu.vector_store %arg4[%c0_56, %c0_57], %251 {strides = array<i32>} : memref<8x128xf32, #tpu.memory_space<vmem>>, vector<8x128xf32>,
    return
  }
  func.func @transform_0(%arg0: i32) -> (i32, i32, i32) {
    %c0_i32 = arith.constant 0 : i32
    %c0_i32_0 = arith.constant 0 : i32
    %c0_i32_1 = arith.constant 0 : i32
    return %arg0, %c0_i32, %c0_i32_0 : i32, i32, i32
  }
  func.func @transform_1(%arg0: i32) -> (i32, i32) {
    %c0_i32 = arith.constant 0 : i32
    %c0_i32_0 = arith.constant 0 : i32
    %c0_i32_1 = arith.constant 0 : i32
    return %c0_i32, %c0_i32_0 : i32, i32
  }
  func.func @transform_2(%arg0: i32) -> (i32, i32) {
    %c0_i32 = arith.constant 0 : i32
    %c0_i32_0 = arith.constant 0 : i32
    %c0_i32_1 = arith.constant 0 : i32
    return %c0_i32, %c0_i32_0 : i32, i32
  }
  func.func @transform_3(%arg0: i32) -> (i32, i32) {
    %c0_i32 = arith.constant 0 : i32
    %c0_i32_0 = arith.constant 0 : i32
    %c0_i32_1 = arith.constant 0 : i32
    return %c0_i32, %c0_i32_0 : i32, i32
  }
}

</mosaic_0001>

<llo_original>
// kernel: tpu_custom_call.1
$region0: #{tpu_custom_call.1}
  #allocation0 [shape = 'u32[]', space=smem, size = 0x4, offset = 0x4, fixed_abs, tag = 'smem constant byte address 0x4 - core index']
  #allocation1 [shape = 'u32[72,128]{1,0:T(1,128)}', space=vmem, size = 0x9000, scoped, tag = 'internal scratch']
  %s0 = inlined_call_operand.hbm [shape: f32[8,8,512], index: 0, kind: input, shape index: {}]
  %s1 = inlined_call_operand.hbm [shape: bf16[128,512], index: 1, kind: input, shape index: {}]
  %s2 = inlined_call_operand.hbm [shape: f32[8,128], index: 2, kind: output, shape index: {0}]
  %s3 = inlined_call_operand.hbm [shape: f32[8,128], index: 3, kind: output, shape index: {1}]
  %4 = xla_tuple %s2, %s3
  %s5 = sld [smem:[#allocation0]]
  $region38: #{tpu_custom_call.1} parent=0
    _
  %s7 = ssub.s32 1, %s5
  %s8 = scalar_select 0, %s7, %s5
  $region1: #{tpu_custom_call.1} parent=0
    #allocation2 [shape = 'u8[131072]{0}', space=vmem, size = 0x20000, scoped, tag = 'input window, operand 0, single buffered']
    #allocation3 [shape = 's32[1]{0}', space=sflag, size = 0x4, scoped, tag = 'scoped memory for tpu_custom_call.1']
    #allocation4 [shape = 's32[1]{0}', space=sflag, size = 0x4, scoped, tag = 'scoped memory for tpu_custom_call.1']
    #allocation5 [shape = 'u8[131072]{0}', space=vmem, size = 0x20000, scoped, tag = 'input window, operand 1, single buffered']
    #allocation6 [shape = 's32[1]{0}', space=sflag, size = 0x4, scoped, tag = 'scoped memory for tpu_custom_call.1']
    #allocation7 [shape = 'u8[4096]{0}', space=vmem, size = 0x1000, scoped, tag = 'output window, operand 0, single buffered']
    #allocation8 [shape = 'u8[4096]{0}', space=vmem, size = 0x1000, scoped, tag = 'output window, operand 1, single buffered']
    #allocation9 [shape = 's32[1]{0}', space=sflag, size = 0x4, scoped, tag = 'scoped memory for tpu_custom_call.1']
    %9 = vsyncpa [#allocation3], 0
    %10 = vsyncpa [#allocation6], 0
    %11 = vsyncpa [#allocation4], 0
    %12 = vsyncpa [#allocation9], 0
    // Predicated region
    $region2: #{tpu_custom_call.1} parent=1 // pred_check
      _
    $region3: #{tpu_custom_call.1} parent=1 // pred_check_branch
      %14 = sbr.rel (0) target = $region5
    $region4: #{tpu_custom_call.1} parent=1 // pred_region
      %16 = vsyncadd [#allocation3], 0
      %s17 = sshll.u32 %s0, 4
      %s18 = int_to_ptr.hbm [resolvable:$true] %s17
      %s19 = sshll.u32 [#allocation2], 4
      %s20 = int_to_ptr.vmem [resolvable:$true] %s19
      %25 = dma.hbm_to_vmem [thread:$0]  %s18, 4096, %s20, [#allocation3], 512, 512, 32
    $region5: #{tpu_custom_call.1} parent=1 // pred_fallthru
      _
    // Predicated region
    $region6: #{tpu_custom_call.1} parent=1 // pred_check
      _
    $region7: #{tpu_custom_call.1} parent=1 // pred_check_branch
      %27 = sbr.rel (0) target = $region9
    $region8: #{tpu_custom_call.1} parent=1 // pred_region
      %29 = vsyncadd [#allocation6], 0
      %s30 = sshll.u32 %s1, 4
      %s31 = int_to_ptr.hbm [resolvable:$true] %s30
      %s32 = sshll.u32 [#allocation5], 4
      %s33 = int_to_ptr.vmem [resolvable:$true] %s32
      %38 = dma.hbm_to_vmem [thread:$0]  %s31, 4096, %s33, [#allocation6], 256, 256, 16
    $region9: #{tpu_custom_call.1} parent=1 // pred_fallthru
      _
    // Predicated region
    $region10: #{tpu_custom_call.1} parent=1 // pred_check
      _
    $region11: #{tpu_custom_call.1} parent=1 // pred_check_branch
      %40 = sbr.rel (0) target = $region13
    $region12: #{tpu_custom_call.1} parent=1 // pred_region
      %42 = dma.done [#allocation3], 4096
    $region13: #{tpu_custom_call.1} parent=1 // pred_fallthru
      _
    // Predicated region
    $region14: #{tpu_custom_call.1} parent=1 // pred_check
      _
    $region15: #{tpu_custom_call.1} parent=1 // pred_check_branch
      %44 = sbr.rel (0) target = $region17
    $region16: #{tpu_custom_call.1} parent=1 // pred_region
      %46 = dma.done [#allocation6], 4096
    $region17: #{tpu_custom_call.1} parent=1 // pred_fallthru
      _
    %p47 = scmp.eq.s32.totalorder 0, 0
    // Predicated region
    $region18: #{tpu_custom_call.1} parent=1 // pred_check
      %p48 = pneg %p47
    $region19: #{tpu_custom_call.1} parent=1 // pred_check_branch
      %50 = sbr.rel (%p48) target = $region21
    $region20: #{tpu_custom_call.1} parent=1 // pred_region
      %51 = vst [vmem:[#allocation7] sm:$0xff] 0.0
      %52 = vst [vmem:[#allocation8] sm:$0xff] 0.0
    $region21: #{tpu_custom_call.1} parent=1 // pred_fallthru
      _
    %v53 = vld [vmem:[#allocation5] sm:$0xff]
    %v54 = vld [vmem:[#allocation5 + $0x8] sm:$0xff]
    %v55 = vld [vmem:[#allocation5 + $0x10] sm:$0xff]
    %v56 = vld [vmem:[#allocation5 + $0x18] sm:$0xff]
    %v57 = vld [vmem:[#allocation5 + $0x20] sm:$0xff]
    %v58 = vld [vmem:[#allocation5 + $0x28] sm:$0xff]
    %v59 = vld [vmem:[#allocation5 + $0x30] sm:$0xff]
    %v60 = vld [vmem:[#allocation5 + $0x38] sm:$0xff]
    %v61 = vld [vmem:[#allocation5 + $0x40] sm:$0xff]
    %v62 = vld [vmem:[#allocation5 + $0x48] sm:$0xff]
    %v63 = vld [vmem:[#allocation5 + $0x50] sm:$0xff]
    %v64 = vld [vmem:[#allocation5 + $0x58] sm:$0xff]
    %v65 = vld [vmem:[#allocation5 + $0x60] sm:$0xff]
    %v66 = vld [vmem:[#allocation5 + $0x68] sm:$0xff]
    %v67 = vld [vmem:[#allocation5 + $0x70] sm:$0xff]
    %v68 = vld [vmem:[#allocation5 + $0x78] sm:$0xff]
    %v69 = vld [vmem:[#allocation5 + $0x80] sm:$0xff]
    %v70 = vld [vmem:[#allocation5 + $0x88] sm:$0xff]
    %v71 = vld [vmem:[#allocation5 + $0x90] sm:$0xff]
    %v72 = vld [vmem:[#allocation5 + $0x98] sm:$0xff]
    %v73 = vld [vmem:[#allocation5 + $0xa0] sm:$0xff]
    %v74 = vld [vmem:[#allocation5 + $0xa8] sm:$0xff]
    %v75 = vld [vmem:[#allocation5 + $0xb0] sm:$0xff]
    %v76 = vld [vmem:[#allocation5 + $0xb8] sm:$0xff]
    %v77 = vld [vmem:[#allocation5 + $0xc0] sm:$0xff]
    %v78 = vld [vmem:[#allocation5 + $0xc8] sm:$0xff]
    %v79 = vld [vmem:[#allocation5 + $0xd0] sm:$0xff]
    %v80 = vld [vmem:[#allocation5 + $0xd8] sm:$0xff]
    %v81 = vld [vmem:[#allocation5 + $0xe0] sm:$0xff]
    %v82 = vld [vmem:[#allocation5 + $0xe8] sm:$0xff]
    %v83 = vld [vmem:[#allocation5 + $0xf0] sm:$0xff]
    %v84 = vld [vmem:[#allocation5 + $0xf8] sm:$0xff]
    %v85 = vld [vmem:[#allocation7] sm:$0xff]
    %v86 = vld [vmem:[#allocation8] sm:$0xff]
    %v87 = vld [vmem:[#allocation2] sm:$0xff]
    %v88 = vld [vmem:[#allocation2 + $0x8] sm:$0xff]
    %v89 = vld [vmem:[#allocation2 + $0x10] sm:$0xff]
    %v90 = vld [vmem:[#allocation2 + $0x18] sm:$0xff]
    %v91 = vpack.c.bf16 %v85, %v85
    %v124 = vunpack.c.l.b16 %v53
    %v125 = vunpack.c.h.b16 %v53
    %v126 = vunpack.c.l.b16 %v54
    %v127 = vunpack.c.h.b16 %v54
    %v128 = vunpack.c.l.b16 %v55
    %v129 = vunpack.c.h.b16 %v55
    %v130 = vunpack.c.l.b16 %v56
    %v131 = vunpack.c.h.b16 %v56
    %v132 = vunpack.c.l.b16 %v57
    %v133 = vunpack.c.h.b16 %v57
    %v134 = vunpack.c.l.b16 %v58
    %v135 = vunpack.c.h.b16 %v58
    %v136 = vunpack.c.l.b16 %v59
    %v137 = vunpack.c.h.b16 %v59
    %v138 = vunpack.c.l.b16 %v60
    %v139 = vunpack.c.h.b16 %v60
    %v140 = vunpack.c.l.b16 %v61
    %v141 = vunpack.c.h.b16 %v61
    %v142 = vunpack.c.l.b16 %v62
    %v143 = vunpack.c.h.b16 %v62
    %v144 = vunpack.c.l.b16 %v63
    %v145 = vunpack.c.h.b16 %v63
    %v146 = vunpack.c.l.b16 %v64
    %v147 = vunpack.c.h.b16 %v64
    %v148 = vunpack.c.l.b16 %v65
    %v149 = vunpack.c.h.b16 %v65
    %v150 = vunpack.c.l.b16 %v66
    %v151 = vunpack.c.h.b16 %v66
    %v152 = vunpack.c.l.b16 %v67
    %v153 = vunpack.c.h.b16 %v67
    %v154 = vunpack.c.l.b16 %v68
    %v155 = vunpack.c.h.b16 %v68
    %v156 = vunpack.c.l.b16 %v69
    %v157 = vunpack.c.h.b16 %v69
    %v158 = vunpack.c.l.b16 %v70
    %v159 = vunpack.c.h.b16 %v70
    %v160 = vunpack.c.l.b16 %v71
    %v161 = vunpack.c.h.b16 %v71
    %v162 = vunpack.c.l.b16 %v72
    %v163 = vunpack.c.h.b16 %v72
    %v164 = vunpack.c.l.b16 %v73
    %v165 = vunpack.c.h.b16 %v73
    %v166 = vunpack.c.l.b16 %v74
    %v167 = vunpack.c.h.b16 %v74
    %v168 = vunpack.c.l.b16 %v75
    %v169 = vunpack.c.h.b16 %v75
    %v170 = vunpack.c.l.b16 %v76
    %v171 = vunpack.c.h.b16 %v76
    %v172 = vunpack.c.l.b16 %v77
    %v173 = vunpack.c.h.b16 %v77
    %v174 = vunpack.c.l.b16 %v78
    %v175 = vunpack.c.h.b16 %v78
    %v176 = vunpack.c.l.b16 %v79
    %v177 = vunpack.c.h.b16 %v79
    %v178 = vunpack.c.l.b16 %v80
    %v179 = vunpack.c.h.b16 %v80
    %v180 = vunpack.c.l.b16 %v81
    %v181 = vunpack.c.h.b16 %v81
    %v182 = vunpack.c.l.b16 %v82
    %v183 = vunpack.c.h.b16 %v82
    %v184 = vunpack.c.l.b16 %v83
    %v185 = vunpack.c.h.b16 %v83
    %v186 = vunpack.c.l.b16 %v84
    %v187 = vunpack.c.h.b16 %v84
    %v188 = vpack.c.b16 %v128, %v124
    %v189 = vpack.c.b16 %v129, %v125
    %v190 = vpack.c.b16 %v130, %v126
    %v191 = vpack.c.b16 %v131, %v127
    %v192 = vpack.c.b16 %v136, %v132
    %v193 = vpack.c.b16 %v137, %v133
    %v194 = vpack.c.b16 %v138, %v134
    %v195 = vpack.c.b16 %v139, %v135
    %v196 = vpack.c.b16 %v144, %v140
    %v197 = vpack.c.b16 %v145, %v141
    %v198 = vpack.c.b16 %v146, %v142
    %v199 = vpack.c.b16 %v147, %v143
    %v200 = vpack.c.b16 %v152, %v148
    %v201 = vpack.c.b16 %v153, %v149
    %v202 = vpack.c.b16 %v154, %v150
    %v203 = vpack.c.b16 %v155, %v151
    %v204 = vpack.c.b16 %v160, %v156
    %v205 = vpack.c.b16 %v161, %v157
    %v206 = vpack.c.b16 %v162, %v158
    %v207 = vpack.c.b16 %v163, %v159
    %v208 = vpack.c.b16 %v168, %v164
    %v209 = vpack.c.b16 %v169, %v165
    %v210 = vpack.c.b16 %v170, %v166
    %v211 = vpack.c.b16 %v171, %v167
    %v212 = vpack.c.b16 %v176, %v172
    %v213 = vpack.c.b16 %v177, %v173
    %v214 = vpack.c.b16 %v178, %v174
    %v215 = vpack.c.b16 %v179, %v175
    %v216 = vpack.c.b16 %v184, %v180
    %v217 = vpack.c.b16 %v185, %v181
    %v218 = vpack.c.b16 %v186, %v182
    %v219 = vpack.c.b16 %v187, %v183
    %252 = vmatpush.bf16.msra.mxu0 %v216
    %253 = vmatpush.bf16.msra.mxu0 %v212
    %254 = vmatpush.bf16.msra.mxu0 %v208
    %255 = vmatpush.bf16.msra.mxu0 %v204
    %256 = vmatpush.bf16.msra.mxu0 %v200
    %257 = vmatpush.bf16.msra.mxu0 %v196
    %258 = vmatpush.bf16.msra.mxu0 %v192
    %259 = vmatpush.bf16.msra.mxu0 %v188
    %260 = vmatmul.bf16.gmra.mxu0 %v91
    %v261 = vpop.f32.mrf.mxu0
    %v262 = vadd.f32 0.0, %v261
    %v263 = vpop.f32.mrf.mxu0
    %264 = vdwg.mxu0
    %265 = vmatpush.bf16.msra.mxu0 %v217
    %266 = vmatpush.bf16.msra.mxu0 %v213
    %267 = vmatpush.bf16.msra.mxu0 %v209
    %268 = vmatpush.bf16.msra.mxu0 %v205
    %269 = vmatpush.bf16.msra.mxu0 %v201
    %270 = vmatpush.bf16.msra.mxu0 %v197
    %271 = vmatpush.bf16.msra.mxu0 %v193
    %272 = vmatpush.bf16.msra.mxu0 %v189
    %273 = vmatmul.bf16.gmra.mxu0 %v91
    %v274 = vpop.f32.mrf.mxu0
    %v275 = vadd.f32 0.0, %v274
    %v276 = vpop.f32.mrf.mxu0
    %277 = vdwg.mxu0
    %278 = vmatpush.bf16.msra.mxu0 %v218
    %279 = vmatpush.bf16.msra.mxu0 %v214
    %280 = vmatpush.bf16.msra.mxu0 %v210
    %281 = vmatpush.bf16.msra.mxu0 %v206
    %282 = vmatpush.bf16.msra.mxu0 %v202
    %283 = vmatpush.bf16.msra.mxu0 %v198
    %284 = vmatpush.bf16.msra.mxu0 %v194
    %285 = vmatpush.bf16.msra.mxu0 %v190
    %286 = vmatmul.bf16.gmra.mxu0 %v91
    %v287 = vpop.f32.mrf.mxu0
    %v288 = vadd.f32 0.0, %v287
    %v289 = vpop.f32.mrf.mxu0
    %290 = vdwg.mxu0
    %291 = vmatpush.bf16.msra.mxu0 %v219
    %292 = vmatpush.bf16.msra.mxu0 %v215
    %293 = vmatpush.bf16.msra.mxu0 %v211
    %294 = vmatpush.bf16.msra.mxu0 %v207
    %295 = vmatpush.bf16.msra.mxu0 %v203
    %296 = vmatpush.bf16.msra.mxu0 %v199
    %297 = vmatpush.bf16.msra.mxu0 %v195
    %298 = vmatpush.bf16.msra.mxu0 %v191
    %299 = vmatmul.bf16.gmra.mxu0 %v91
    %v300 = vpop.f32.mrf.mxu0
    %v301 = vadd.f32 0.0, %v300
    %v302 = vpop.f32.mrf.mxu0
    %303 = vdwg.mxu0
    %v304 = vadd.f32 %v87, %v262
    %v305 = vadd.f32 %v88, %v275
    %v306 = vadd.f32 %v89, %v288
    %v307 = vadd.f32 %v90, %v301
    %v308 = vxor.u32 %v304, 2147483648
    %v309 = vmul.f32 %v308, 1.442695
    %v310 = vpow.pop %v309
    %v311 = vadd.f32 %v310, 1.0
    %v312 = vrcp.pop %v311
    %v313 = vmul.f32 %v311, %v312
    %v314 = vsub.f32 1.0, %v313
    %v315 = vmul.f32 %v312, %v314
    %v316 = vadd.f32 %v312, %v315
    %vm317 = vweird.f32 %v311
    %vm318 = vweird.f32 %v312
    %vm319 = vmor %vm317, %vm318
    %v320 = vsel %vm319, %v312, %v316
    %v321 = vand.u32 2147483647, %v311
    %vm322 = vcmp.eq.f32.partialorder %v321, 8.507059e+37
    %v323 = vand.u32 %v311, 2147483648
    %v324 = vor.u32 1.1754944e-38, %v323
    %v325 = vsel %vm322, %v324, %v320
    %v326 = vmul.f32 1.0, %v325
    %v327 = vxor.u32 %v305, 2147483648
    %v328 = vmul.f32 %v327, 1.442695
    %v329 = vpow.pop %v328
    %v330 = vadd.f32 %v329, 1.0
    %v331 = vrcp.pop %v330
    %v332 = vmul.f32 %v330, %v331
    %v333 = vsub.f32 1.0, %v332
    %v334 = vmul.f32 %v331, %v333
    %v335 = vadd.f32 %v331, %v334
    %vm336 = vweird.f32 %v330
    %vm337 = vweird.f32 %v331
    %vm338 = vmor %vm336, %vm337
    %v339 = vsel %vm338, %v331, %v335
    %v340 = vand.u32 2147483647, %v330
    %vm341 = vcmp.eq.f32.partialorder %v340, 8.507059e+37
    %v342 = vand.u32 %v330, 2147483648
    %v343 = vor.u32 1.1754944e-38, %v342
    %v344 = vsel %vm341, %v343, %v339
    %v345 = vmul.f32 1.0, %v344
    %v346 = vtanh.pop %v306
    %v347 = vxor.u32 %v307, 2147483648
    %v348 = vmul.f32 %v347, 1.442695
    %v349 = vpow.pop %v348
    %v350 = vadd.f32 %v349, 1.0
    %v351 = vrcp.pop %v350
    %v352 = vmul.f32 %v350, %v351
    %v353 = vsub.f32 1.0, %v352
    %v354 = vmul.f32 %v351, %v353
    %v355 = vadd.f32 %v351, %v354
    %vm356 = vweird.f32 %v350
    %vm357 = vweird.f32 %v351
    %vm358 = vmor %vm356, %vm357
    %v359 = vsel %vm358, %v351, %v355
    %v360 = vand.u32 2147483647, %v350
    %vm361 = vcmp.eq.f32.partialorder %v360, 8.507059e+37
    %v362 = vand.u32 %v350, 2147483648
    %v363 = vor.u32 1.1754944e-38, %v362
    %v364 = vsel %vm361, %v363, %v359
    %v365 = vmul.f32 1.0, %v364
    %v366 = vmul.f32 %v345, %v86
    %v367 = vmul.f32 %v326, %v346
    %v368 = vadd.f32 %v366, %v367
    %v369 = vtanh.pop %v368
    %v370 = vmul.f32 %v365, %v369
    %s371 = scalar_lea.vmem [#allocation2], 32
    %v372 = vld [vmem:[%s371] sm:$0xff]
    %v373 = vld [vmem:[%s371 + $0x8] sm:$0xff]
    %v374 = vld [vmem:[%s371 + $0x10] sm:$0xff]
    %v375 = vld [vmem:[%s371 + $0x18] sm:$0xff]
    %v376 = vpack.c.bf16 %v370, %v370
    %377 = vmatpush.bf16.msra.mxu0 %v216
    %378 = vmatpush.bf16.msra.mxu0 %v212
    %379 = vmatpush.bf16.msra.mxu0 %v208
    %380 = vmatpush.bf16.msra.mxu0 %v204
    %381 = vmatpush.bf16.msra.mxu0 %v200
    %382 = vmatpush.bf16.msra.mxu0 %v196
    %383 = vmatpush.bf16.msra.mxu0 %v192
    %384 = vmatpush.bf16.msra.mxu0 %v188
    %385 = vmatmul.bf16.gmra.mxu0 %v376
    %v386 = vpop.f32.mrf.mxu0
    %v387 = vadd.f32 0.0, %v386
    %v388 = vpop.f32.mrf.mxu0
    %389 = vdwg.mxu0
    %390 = vmatpush.bf16.msra.mxu0 %v217
    %391 = vmatpush.bf16.msra.mxu0 %v213
    %392 = vmatpush.bf16.msra.mxu0 %v209
    %393 = vmatpush.bf16.msra.mxu0 %v205
    %394 = vmatpush.bf16.msra.mxu0 %v201
    %395 = vmatpush.bf16.msra.mxu0 %v197
    %396 = vmatpush.bf16.msra.mxu0 %v193
    %397 = vmatpush.bf16.msra.mxu0 %v189
    %398 = vmatmul.bf16.gmra.mxu0 %v376
    %v399 = vpop.f32.mrf.mxu0
    %v400 = vadd.f32 0.0, %v399
    %v401 = vpop.f32.mrf.mxu0
    %402 = vdwg.mxu0
    %403 = vmatpush.bf16.msra.mxu0 %v218
    %404 = vmatpush.bf16.msra.mxu0 %v214
    %405 = vmatpush.bf16.msra.mxu0 %v210
    %406 = vmatpush.bf16.msra.mxu0 %v206
    %407 = vmatpush.bf16.msra.mxu0 %v202
    %408 = vmatpush.bf16.msra.mxu0 %v198
    %409 = vmatpush.bf16.msra.mxu0 %v194
    %410 = vmatpush.bf16.msra.mxu0 %v190
    %411 = vmatmul.bf16.gmra.mxu0 %v376
    %v412 = vpop.f32.mrf.mxu0
    %v413 = vadd.f32 0.0, %v412
    %v414 = vpop.f32.mrf.mxu0
    %415 = vdwg.mxu0
    %416 = vmatpush.bf16.msra.mxu0 %v219
    %417 = vmatpush.bf16.msra.mxu0 %v215
    %418 = vmatpush.bf16.msra.mxu0 %v211
    %419 = vmatpush.bf16.msra.mxu0 %v207
    %420 = vmatpush.bf16.msra.mxu0 %v203
    %421 = vmatpush.bf16.msra.mxu0 %v199
    %422 = vmatpush.bf16.msra.mxu0 %v195
    %423 = vmatpush.bf16.msra.mxu0 %v191
    %424 = vmatmul.bf16.gmra.mxu0 %v376
    %v425 = vpop.f32.mrf.mxu0
    %v426 = vadd.f32 0.0, %v425
    %v427 = vpop.f32.mrf.mxu0
    %428 = vdwg.mxu0
    %v429 = vadd.f32 %v372, %v387
    %v430 = vadd.f32 %v373, %v400
    %v431 = vadd.f32 %v374, %v413
    %v432 = vadd.f32 %v375, %v426
    %v433 = vxor.u32 %v429, 2147483648
    %v434 = vmul.f32 %v433, 1.442695
    %v435 = vpow.pop %v434
    %v436 = vadd.f32 %v435, 1.0
    %v437 = vrcp.pop %v436
    %v438 = vmul.f32 %v436, %v437
    %v439 = vsub.f32 1.0, %v438
    %v440 = vmul.f32 %v437, %v439
    %v441 = vadd.f32 %v437, %v440
    %vm442 = vweird.f32 %v436
    %vm443 = vweird.f32 %v437
    %vm444 = vmor %vm442, %vm443
    %v445 = vsel %vm444, %v437, %v441
    %v446 = vand.u32 2147483647, %v436
    %vm447 = vcmp.eq.f32.partialorder %v446, 8.507059e+37
    %v448 = vand.u32 %v436, 2147483648
    %v449 = vor.u32 1.1754944e-38, %v448
    %v450 = vsel %vm447, %v449, %v445
    %v451 = vmul.f32 1.0, %v450
    %v452 = vxor.u32 %v430, 2147483648
    %v453 = vmul.f32 %v452, 1.442695
    %v454 = vpow.pop %v453
    %v455 = vadd.f32 %v454, 1.0
    %v456 = vrcp.pop %v455
    %v457 = vmul.f32 %v455, %v456
    %v458 = vsub.f32 1.0, %v457
    %v459 = vmul.f32 %v456, %v458
    %v460 = vadd.f32 %v456, %v459
    %vm461 = vweird.f32 %v455
    %vm462 = vweird.f32 %v456
    %vm463 = vmor %vm461, %vm462
    %v464 = vsel %vm463, %v456, %v460
    %v465 = vand.u32 2147483647, %v455
    %vm466 = vcmp.eq.f32.partialorder %v465, 8.507059e+37
    %v467 = vand.u32 %v455, 2147483648
    %v468 = vor.u32 1.1754944e-38, %v467
    %v469 = vsel %vm466, %v468, %v464
    %v470 = vmul.f32 1.0, %v469
    %v471 = vtanh.pop %v431
    %v472 = vxor.u32 %v432, 2147483648
    %v473 = vmul.f32 %v472, 1.442695
    %v474 = vpow.pop %v473
    %v475 = vadd.f32 %v474, 1.0
    %v476 = vrcp.pop %v475
    %v477 = vmul.f32 %v475, %v476
    %v478 = vsub.f32 1.0, %v477
    %v479 = vmul.f32 %v476, %v478
    %v480 = vadd.f32 %v476, %v479
    %vm481 = vweird.f32 %v475
    %vm482 = vweird.f32 %v476
    %vm483 = vmor %vm481, %vm482
    %v484 = vsel %vm483, %v476, %v480
    %v485 = vand.u32 2147483647, %v475
    %vm486 = vcmp.eq.f32.partialorder %v485, 8.507059e+37
    %v487 = vand.u32 %v475, 2147483648
    %v488 = vor.u32 1.1754944e-38, %v487
    %v489 = vsel %vm486, %v488, %v484
    %v490 = vmul.f32 1.0, %v489
    %v491 = vmul.f32 %v470, %v368
    %v492 = vmul.f32 %v451, %v471
    %v493 = vadd.f32 %v491, %v492
    %v494 = vtanh.pop %v493
    %v495 = vmul.f32 %v490, %v494
    %s496 = scalar_lea.vmem [#allocation2], 64
    %v497 = vld [vmem:[%s496] sm:$0xff]
    %v498 = vld [vmem:[%s496 + $0x8] sm:$0xff]
    %v499 = vld [vmem:[%s496 + $0x10] sm:$0xff]
    %v500 = vld [vmem:[%s496 + $0x18] sm:$0xff]
    %v501 = vpack.c.bf16 %v495, %v495
    %502 = vmatpush.bf16.msra.mxu0 %v216
    %503 = vmatpush.bf16.msra.mxu0 %v212
    %504 = vmatpush.bf16.msra.mxu0 %v208
    %505 = vmatpush.bf16.msra.mxu0 %v204
    %506 = vmatpush.bf16.msra.mxu0 %v200
    %507 = vmatpush.bf16.msra.mxu0 %v196
    %508 = vmatpush.bf16.msra.mxu0 %v192
    %509 = vmatpush.bf16.msra.mxu0 %v188
    %510 = vmatmul.bf16.gmra.mxu0 %v501
    %v511 = vpop.f32.mrf.mxu0
    %v512 = vadd.f32 0.0, %v511
    %v513 = vpop.f32.mrf.mxu0
    %514 = vdwg.mxu0
    %515 = vmatpush.bf16.msra.mxu0 %v217
    %516 = vmatpush.bf16.msra.mxu0 %v213
    %517 = vmatpush.bf16.msra.mxu0 %v209
    %518 = vmatpush.bf16.msra.mxu0 %v205
    %519 = vmatpush.bf16.msra.mxu0 %v201
    %520 = vmatpush.bf16.msra.mxu0 %v197
    %521 = vmatpush.bf16.msra.mxu0 %v193
    %522 = vmatpush.bf16.msra.mxu0 %v189
    %523 = vmatmul.bf16.gmra.mxu0 %v501
    %v524 = vpop.f32.mrf.mxu0
    %v525 = vadd.f32 0.0, %v524
    %v526 = vpop.f32.mrf.mxu0
    %527 = vdwg.mxu0
    %528 = vmatpush.bf16.msra.mxu0 %v218
    %529 = vmatpush.bf16.msra.mxu0 %v214
    %530 = vmatpush.bf16.msra.mxu0 %v210
    %531 = vmatpush.bf16.msra.mxu0 %v206
    %532 = vmatpush.bf16.msra.mxu0 %v202
    %533 = vmatpush.bf16.msra.mxu0 %v198
    %534 = vmatpush.bf16.msra.mxu0 %v194
    %535 = vmatpush.bf16.msra.mxu0 %v190
    %536 = vmatmul.bf16.gmra.mxu0 %v501
    %v537 = vpop.f32.mrf.mxu0
    %v538 = vadd.f32 0.0, %v537
    %v539 = vpop.f32.mrf.mxu0
    %540 = vdwg.mxu0
    %541 = vmatpush.bf16.msra.mxu0 %v219
    %542 = vmatpush.bf16.msra.mxu0 %v215
    %543 = vmatpush.bf16.msra.mxu0 %v211
    %544 = vmatpush.bf16.msra.mxu0 %v207
    %545 = vmatpush.bf16.msra.mxu0 %v203
    %546 = vmatpush.bf16.msra.mxu0 %v199
    %547 = vmatpush.bf16.msra.mxu0 %v195
    %548 = vmatpush.bf16.msra.mxu0 %v191
    %549 = vmatmul.bf16.gmra.mxu0 %v501
    %v550 = vpop.f32.mrf.mxu0
    %v551 = vadd.f32 0.0, %v550
    %v552 = vpop.f32.mrf.mxu0
    %553 = vdwg.mxu0
    %v554 = vadd.f32 %v497, %v512
    %v555 = vadd.f32 %v498, %v525
    %v556 = vadd.f32 %v499, %v538
    %v557 = vadd.f32 %v500, %v551
    %v558 = vxor.u32 %v554, 2147483648
    %v559 = vmul.f32 %v558, 1.442695
    %v560 = vpow.pop %v559
    %v561 = vadd.f32 %v560, 1.0
    %v562 = vrcp.pop %v561
    %v563 = vmul.f32 %v561, %v562
    %v564 = vsub.f32 1.0, %v563
    %v565 = vmul.f32 %v562, %v564
    %v566 = vadd.f32 %v562, %v565
    %vm567 = vweird.f32 %v561
    %vm568 = vweird.f32 %v562
    %vm569 = vmor %vm567, %vm568
    %v570 = vsel %vm569, %v562, %v566
    %v571 = vand.u32 2147483647, %v561
    %vm572 = vcmp.eq.f32.partialorder %v571, 8.507059e+37
    %v573 = vand.u32 %v561, 2147483648
    %v574 = vor.u32 1.1754944e-38, %v573
    %v575 = vsel %vm572, %v574, %v570
    %v576 = vmul.f32 1.0, %v575
    %v577 = vxor.u32 %v555, 2147483648
    %v578 = vmul.f32 %v577, 1.442695
    %v579 = vpow.pop %v578
    %v580 = vadd.f32 %v579, 1.0
    %v581 = vrcp.pop %v580
    %v582 = vmul.f32 %v580, %v581
    %v583 = vsub.f32 1.0, %v582
    %v584 = vmul.f32 %v581, %v583
    %v585 = vadd.f32 %v581, %v584
    %vm586 = vweird.f32 %v580
    %vm587 = vweird.f32 %v581
    %vm588 = vmor %vm586, %vm587
    %v589 = vsel %vm588, %v581, %v585
    %v590 = vand.u32 2147483647, %v580
    %vm591 = vcmp.eq.f32.partialorder %v590, 8.507059e+37
    %v592 = vand.u32 %v580, 2147483648
    %v593 = vor.u32 1.1754944e-38, %v592
    %v594 = vsel %vm591, %v593, %v589
    %v595 = vmul.f32 1.0, %v594
    %v596 = vtanh.pop %v556
    %v597 = vxor.u32 %v557, 2147483648
    %v598 = vmul.f32 %v597, 1.442695
    %v599 = vpow.pop %v598
    %v600 = vadd.f32 %v599, 1.0
    %v601 = vrcp.pop %v600
    %v602 = vmul.f32 %v600, %v601
    %v603 = vsub.f32 1.0, %v602
    %v604 = vmul.f32 %v601, %v603
    %v605 = vadd.f32 %v601, %v604
    %vm606 = vweird.f32 %v600
    %vm607 = vweird.f32 %v601
    %vm608 = vmor %vm606, %vm607
    %v609 = vsel %vm608, %v601, %v605
    %v610 = vand.u32 2147483647, %v600
    %vm611 = vcmp.eq.f32.partialorder %v610, 8.507059e+37
    %v612 = vand.u32 %v600, 2147483648
    %v613 = vor.u32 1.1754944e-38, %v612
    %v614 = vsel %vm611, %v613, %v609
    %v615 = vmul.f32 1.0, %v614
    %v616 = vmul.f32 %v595, %v493
    %v617 = vmul.f32 %v576, %v596
    %v618 = vadd.f32 %v616, %v617
    %v619 = vtanh.pop %v618
    %v620 = vmul.f32 %v615, %v619
    %s621 = scalar_lea.vmem [#allocation2], 96
    %v622 = vld [vmem:[%s621] sm:$0xff]
    %v623 = vld [vmem:[%s621 + $0x8] sm:$0xff]
    %v624 = vld [vmem:[%s621 + $0x10] sm:$0xff]
    %v625 = vld [vmem:[%s621 + $0x18] sm:$0xff]
    %v626 = vpack.c.bf16 %v620, %v620
    %627 = vmatpush.bf16.msra.mxu0 %v216
    %628 = vmatpush.bf16.msra.mxu0 %v212
    %629 = vmatpush.bf16.msra.mxu0 %v208
    %630 = vmatpush.bf16.msra.mxu0 %v204
    %631 = vmatpush.bf16.msra.mxu0 %v200
    %632 = vmatpush.bf16.msra.mxu0 %v196
    %633 = vmatpush.bf16.msra.mxu0 %v192
    %634 = vmatpush.bf16.msra.mxu0 %v188
    %635 = vmatmul.bf16.gmra.mxu0 %v626
    %v636 = vpop.f32.mrf.mxu0
    %v637 = vadd.f32 0.0, %v636
    %v638 = vpop.f32.mrf.mxu0
    %639 = vdwg.mxu0
    %640 = vmatpush.bf16.msra.mxu0 %v217
    %641 = vmatpush.bf16.msra.mxu0 %v213
    %642 = vmatpush.bf16.msra.mxu0 %v209
    %643 = vmatpush.bf16.msra.mxu0 %v205
    %644 = vmatpush.bf16.msra.mxu0 %v201
    %645 = vmatpush.bf16.msra.mxu0 %v197
    %646 = vmatpush.bf16.msra.mxu0 %v193
    %647 = vmatpush.bf16.msra.mxu0 %v189
    %648 = vmatmul.bf16.gmra.mxu0 %v626
    %v649 = vpop.f32.mrf.mxu0
    %v650 = vadd.f32 0.0, %v649
    %v651 = vpop.f32.mrf.mxu0
    %652 = vdwg.mxu0
    %653 = vmatpush.bf16.msra.mxu0 %v218
    %654 = vmatpush.bf16.msra.mxu0 %v214
    %655 = vmatpush.bf16.msra.mxu0 %v210
    %656 = vmatpush.bf16.msra.mxu0 %v206
    %657 = vmatpush.bf16.msra.mxu0 %v202
    %658 = vmatpush.bf16.msra.mxu0 %v198
    %659 = vmatpush.bf16.msra.mxu0 %v194
    %660 = vmatpush.bf16.msra.mxu0 %v190
    %661 = vmatmul.bf16.gmra.mxu0 %v626
    %v662 = vpop.f32.mrf.mxu0
    %v663 = vadd.f32 0.0, %v662
    %v664 = vpop.f32.mrf.mxu0
    %665 = vdwg.mxu0
    %666 = vmatpush.bf16.msra.mxu0 %v219
    %667 = vmatpush.bf16.msra.mxu0 %v215
    %668 = vmatpush.bf16.msra.mxu0 %v211
    %669 = vmatpush.bf16.msra.mxu0 %v207
    %670 = vmatpush.bf16.msra.mxu0 %v203
    %671 = vmatpush.bf16.msra.mxu0 %v199
    %672 = vmatpush.bf16.msra.mxu0 %v195
    %673 = vmatpush.bf16.msra.mxu0 %v191
    %674 = vmatmul.bf16.gmra.mxu0 %v626
    %v675 = vpop.f32.mrf.mxu0
    %v676 = vadd.f32 0.0, %v675
    %v677 = vpop.f32.mrf.mxu0
    %678 = vdwg.mxu0
    %v679 = vadd.f32 %v622, %v637
    %v680 = vadd.f32 %v623, %v650
    %v681 = vadd.f32 %v624, %v663
    %v682 = vadd.f32 %v625, %v676
    %v683 = vxor.u32 %v679, 2147483648
    %v684 = vmul.f32 %v683, 1.442695
    %v685 = vpow.pop %v684
    %v686 = vadd.f32 %v685, 1.0
    %v687 = vrcp.pop %v686
    %v688 = vmul.f32 %v686, %v687
    %v689 = vsub.f32 1.0, %v688
    %v690 = vmul.f32 %v687, %v689
    %v691 = vadd.f32 %v687, %v690
    %vm692 = vweird.f32 %v686
    %vm693 = vweird.f32 %v687
    %vm694 = vmor %vm692, %vm693
    %v695 = vsel %vm694, %v687, %v691
    %v696 = vand.u32 2147483647, %v686
    %vm697 = vcmp.eq.f32.partialorder %v696, 8.507059e+37
    %v698 = vand.u32 %v686, 2147483648
    %v699 = vor.u32 1.1754944e-38, %v698
    %v700 = vsel %vm697, %v699, %v695
    %v701 = vmul.f32 1.0, %v700
    %v702 = vxor.u32 %v680, 2147483648
    %v703 = vmul.f32 %v702, 1.442695
    %v704 = vpow.pop %v703
    %v705 = vadd.f32 %v704, 1.0
    %v706 = vrcp.pop %v705
    %v707 = vmul.f32 %v705, %v706
    %v708 = vsub.f32 1.0, %v707
    %v709 = vmul.f32 %v706, %v708
    %v710 = vadd.f32 %v706, %v709
    %vm711 = vweird.f32 %v705
    %vm712 = vweird.f32 %v706
    %vm713 = vmor %vm711, %vm712
    %v714 = vsel %vm713, %v706, %v710
    %v715 = vand.u32 2147483647, %v705
    %vm716 = vcmp.eq.f32.partialorder %v715, 8.507059e+37
    %v717 = vand.u32 %v705, 2147483648
    %v718 = vor.u32 1.1754944e-38, %v717
    %v719 = vsel %vm716, %v718, %v714
    %v720 = vmul.f32 1.0, %v719
    %v721 = vtanh.pop %v681
    %v722 = vxor.u32 %v682, 2147483648
    %v723 = vmul.f32 %v722, 1.442695
    %v724 = vpow.pop %v723
    %v725 = vadd.f32 %v724, 1.0
    %v726 = vrcp.pop %v725
    %v727 = vmul.f32 %v725, %v726
    %v728 = vsub.f32 1.0, %v727
    %v729 = vmul.f32 %v726, %v728
    %v730 = vadd.f32 %v726, %v729
    %vm731 = vweird.f32 %v725
    %vm732 = vweird.f32 %v726
    %vm733 = vmor %vm731, %vm732
    %v734 = vsel %vm733, %v726, %v730
    %v735 = vand.u32 2147483647, %v725
    %vm736 = vcmp.eq.f32.partialorder %v735, 8.507059e+37
    %v737 = vand.u32 %v725, 2147483648
    %v738 = vor.u32 1.1754944e-38, %v737
    %v739 = vsel %vm736, %v738, %v734
    %v740 = vmul.f32 1.0, %v739
    %v741 = vmul.f32 %v720, %v618
    %v742 = vmul.f32 %v701, %v721
    %v743 = vadd.f32 %v741, %v742
    %v744 = vtanh.pop %v743
    %v745 = vmul.f32 %v740, %v744
    %s746 = scalar_lea.vmem [#allocation2], 128
    %v747 = vld [vmem:[%s746] sm:$0xff]
    %v748 = vld [vmem:[%s746 + $0x8] sm:$0xff]
    %v749 = vld [vmem:[%s746 + $0x10] sm:$0xff]
    %v750 = vld [vmem:[%s746 + $0x18] sm:$0xff]
    %v751 = vpack.c.bf16 %v745, %v745
    %752 = vmatpush.bf16.msra.mxu0 %v216
    %753 = vmatpush.bf16.msra.mxu0 %v212
    %754 = vmatpush.bf16.msra.mxu0 %v208
    %755 = vmatpush.bf16.msra.mxu0 %v204
    %756 = vmatpush.bf16.msra.mxu0 %v200
    %757 = vmatpush.bf16.msra.mxu0 %v196
    %758 = vmatpush.bf16.msra.mxu0 %v192
    %759 = vmatpush.bf16.msra.mxu0 %v188
    %760 = vmatmul.bf16.gmra.mxu0 %v751
    %v761 = vpop.f32.mrf.mxu0
    %v762 = vadd.f32 0.0, %v761
    %v763 = vpop.f32.mrf.mxu0
    %764 = vdwg.mxu0
    %765 = vmatpush.bf16.msra.mxu0 %v217
    %766 = vmatpush.bf16.msra.mxu0 %v213
    %767 = vmatpush.bf16.msra.mxu0 %v209
    %768 = vmatpush.bf16.msra.mxu0 %v205
    %769 = vmatpush.bf16.msra.mxu0 %v201
    %770 = vmatpush.bf16.msra.mxu0 %v197
    %771 = vmatpush.bf16.msra.mxu0 %v193
    %772 = vmatpush.bf16.msra.mxu0 %v189
    %773 = vmatmul.bf16.gmra.mxu0 %v751
    %v774 = vpop.f32.mrf.mxu0
    %v775 = vadd.f32 0.0, %v774
    %v776 = vpop.f32.mrf.mxu0
    %777 = vdwg.mxu0
    %778 = vmatpush.bf16.msra.mxu0 %v218
    %779 = vmatpush.bf16.msra.mxu0 %v214
    %780 = vmatpush.bf16.msra.mxu0 %v210
    %781 = vmatpush.bf16.msra.mxu0 %v206
    %782 = vmatpush.bf16.msra.mxu0 %v202
    %783 = vmatpush.bf16.msra.mxu0 %v198
    %784 = vmatpush.bf16.msra.mxu0 %v194
    %785 = vmatpush.bf16.msra.mxu0 %v190
    %786 = vmatmul.bf16.gmra.mxu0 %v751
    %v787 = vpop.f32.mrf.mxu0
    %v788 = vadd.f32 0.0, %v787
    %v789 = vpop.f32.mrf.mxu0
    %790 = vdwg.mxu0
    %791 = vmatpush.bf16.msra.mxu0 %v219
    %792 = vmatpush.bf16.msra.mxu0 %v215
    %793 = vmatpush.bf16.msra.mxu0 %v211
    %794 = vmatpush.bf16.msra.mxu0 %v207
    %795 = vmatpush.bf16.msra.mxu0 %v203
    %796 = vmatpush.bf16.msra.mxu0 %v199
    %797 = vmatpush.bf16.msra.mxu0 %v195
    %798 = vmatpush.bf16.msra.mxu0 %v191
    %799 = vmatmul.bf16.gmra.mxu0 %v751
    %v800 = vpop.f32.mrf.mxu0
    %v801 = vadd.f32 0.0, %v800
    %v802 = vpop.f32.mrf.mxu0
    %803 = vdwg.mxu0
    %v804 = vadd.f32 %v747, %v762
    %v805 = vadd.f32 %v748, %v775
    %v806 = vadd.f32 %v749, %v788
    %v807 = vadd.f32 %v750, %v801
    %v808 = vxor.u32 %v804, 2147483648
    %v809 = vmul.f32 %v808, 1.442695
    %v810 = vpow.pop %v809
    %v811 = vadd.f32 %v810, 1.0
    %v812 = vrcp.pop %v811
    %v813 = vmul.f32 %v811, %v812
    %v814 = vsub.f32 1.0, %v813
    %v815 = vmul.f32 %v812, %v814
    %v816 = vadd.f32 %v812, %v815
    %vm817 = vweird.f32 %v811
    %vm818 = vweird.f32 %v812
    %vm819 = vmor %vm817, %vm818
    %v820 = vsel %vm819, %v812, %v816
    %v821 = vand.u32 2147483647, %v811
    %vm822 = vcmp.eq.f32.partialorder %v821, 8.507059e+37
    %v823 = vand.u32 %v811, 2147483648
    %v824 = vor.u32 1.1754944e-38, %v823
    %v825 = vsel %vm822, %v824, %v820
    %v826 = vmul.f32 1.0, %v825
    %v827 = vxor.u32 %v805, 2147483648
    %v828 = vmul.f32 %v827, 1.442695
    %v829 = vpow.pop %v828
    %v830 = vadd.f32 %v829, 1.0
    %v831 = vrcp.pop %v830
    %v832 = vmul.f32 %v830, %v831
    %v833 = vsub.f32 1.0, %v832
    %v834 = vmul.f32 %v831, %v833
    %v835 = vadd.f32 %v831, %v834
    %vm836 = vweird.f32 %v830
    %vm837 = vweird.f32 %v831
    %vm838 = vmor %vm836, %vm837
    %v839 = vsel %vm838, %v831, %v835
    %v840 = vand.u32 2147483647, %v830
    %vm841 = vcmp.eq.f32.partialorder %v840, 8.507059e+37
    %v842 = vand.u32 %v830, 2147483648
    %v843 = vor.u32 1.1754944e-38, %v842
    %v844 = vsel %vm841, %v843, %v839
    %v845 = vmul.f32 1.0, %v844
    %v846 = vtanh.pop %v806
    %v847 = vxor.u32 %v807, 2147483648
    %v848 = vmul.f32 %v847, 1.442695
    %v849 = vpow.pop %v848
    %v850 = vadd.f32 %v849, 1.0
    %v851 = vrcp.pop %v850
    %v852 = vmul.f32 %v850, %v851
    %v853 = vsub.f32 1.0, %v852
    %v854 = vmul.f32 %v851, %v853
    %v855 = vadd.f32 %v851, %v854
    %vm856 = vweird.f32 %v850
    %vm857 = vweird.f32 %v851
    %vm858 = vmor %vm856, %vm857
    %v859 = vsel %vm858, %v851, %v855
    %v860 = vand.u32 2147483647, %v850
    %vm861 = vcmp.eq.f32.partialorder %v860, 8.507059e+37
    %v862 = vand.u32 %v850, 2147483648
    %v863 = vor.u32 1.1754944e-38, %v862
    %v864 = vsel %vm861, %v863, %v859
    %v865 = vmul.f32 1.0, %v864
    %v866 = vmul.f32 %v845, %v743
    %v867 = vmul.f32 %v826, %v846
    %v868 = vadd.f32 %v866, %v867
    %v869 = vtanh.pop %v868
    %v870 = vmul.f32 %v865, %v869
    %s871 = scalar_lea.vmem [#allocation2], 160
    %v872 = vld [vmem:[%s871] sm:$0xff]
    %v873 = vld [vmem:[%s871 + $0x8] sm:$0xff]
    %v874 = vld [vmem:[%s871 + $0x10] sm:$0xff]
    %v875 = vld [vmem:[%s871 + $0x18] sm:$0xff]
    %v876 = vpack.c.bf16 %v870, %v870
    %877 = vmatpush.bf16.msra.mxu0 %v216
    %878 = vmatpush.bf16.msra.mxu0 %v212
    %879 = vmatpush.bf16.msra.mxu0 %v208
    %880 = vmatpush.bf16.msra.mxu0 %v204
    %881 = vmatpush.bf16.msra.mxu0 %v200
    %882 = vmatpush.bf16.msra.mxu0 %v196
    %883 = vmatpush.bf16.msra.mxu0 %v192
    %884 = vmatpush.bf16.msra.mxu0 %v188
    %885 = vmatmul.bf16.gmra.mxu0 %v876
    %v886 = vpop.f32.mrf.mxu0
    %v887 = vadd.f32 0.0, %v886
    %v888 = vpop.f32.mrf.mxu0
    %889 = vdwg.mxu0
    %890 = vmatpush.bf16.msra.mxu0 %v217
    %891 = vmatpush.bf16.msra.mxu0 %v213
    %892 = vmatpush.bf16.msra.mxu0 %v209
    %893 = vmatpush.bf16.msra.mxu0 %v205
    %894 = vmatpush.bf16.msra.mxu0 %v201
    %895 = vmatpush.bf16.msra.mxu0 %v197
    %896 = vmatpush.bf16.msra.mxu0 %v193
    %897 = vmatpush.bf16.msra.mxu0 %v189
    %898 = vmatmul.bf16.gmra.mxu0 %v876
    %v899 = vpop.f32.mrf.mxu0
    %v900 = vadd.f32 0.0, %v899
    %v901 = vpop.f32.mrf.mxu0
    %902 = vdwg.mxu0
    %903 = vmatpush.bf16.msra.mxu0 %v218
    %904 = vmatpush.bf16.msra.mxu0 %v214
    %905 = vmatpush.bf16.msra.mxu0 %v210
    %906 = vmatpush.bf16.msra.mxu0 %v206
    %907 = vmatpush.bf16.msra.mxu0 %v202
    %908 = vmatpush.bf16.msra.mxu0 %v198
    %909 = vmatpush.bf16.msra.mxu0 %v194
    %910 = vmatpush.bf16.msra.mxu0 %v190
    %911 = vmatmul.bf16.gmra.mxu0 %v876
    %v912 = vpop.f32.mrf.mxu0
    %v913 = vadd.f32 0.0, %v912
    %v914 = vpop.f32.mrf.mxu0
    %915 = vdwg.mxu0
    %916 = vmatpush.bf16.msra.mxu0 %v219
    %917 = vmatpush.bf16.msra.mxu0 %v215
    %918 = vmatpush.bf16.msra.mxu0 %v211
    %919 = vmatpush.bf16.msra.mxu0 %v207
    %920 = vmatpush.bf16.msra.mxu0 %v203
    %921 = vmatpush.bf16.msra.mxu0 %v199
    %922 = vmatpush.bf16.msra.mxu0 %v195
    %923 = vmatpush.bf16.msra.mxu0 %v191
    %924 = vmatmul.bf16.gmra.mxu0 %v876
    %v925 = vpop.f32.mrf.mxu0
    %v926 = vadd.f32 0.0, %v925
    %v927 = vpop.f32.mrf.mxu0
    %928 = vdwg.mxu0
    %v929 = vadd.f32 %v872, %v887
    %v930 = vadd.f32 %v873, %v900
    %v931 = vadd.f32 %v874, %v913
    %v932 = vadd.f32 %v875, %v926
    %v933 = vxor.u32 %v929, 2147483648
    %v934 = vmul.f32 %v933, 1.442695
    %v935 = vpow.pop %v934
    %v936 = vadd.f32 %v935, 1.0
    %v937 = vrcp.pop %v936
    %v938 = vmul.f32 %v936, %v937
    %v939 = vsub.f32 1.0, %v938
    %v940 = vmul.f32 %v937, %v939
    %v941 = vadd.f32 %v937, %v940
    %vm942 = vweird.f32 %v936
    %vm943 = vweird.f32 %v937
    %vm944 = vmor %vm942, %vm943
    %v945 = vsel %vm944, %v937, %v941
    %v946 = vand.u32 2147483647, %v936
    %vm947 = vcmp.eq.f32.partialorder %v946, 8.507059e+37
    %v948 = vand.u32 %v936, 2147483648
    %v949 = vor.u32 1.1754944e-38, %v948
    %v950 = vsel %vm947, %v949, %v945
    %v951 = vmul.f32 1.0, %v950
    %v952 = vxor.u32 %v930, 2147483648
    %v953 = vmul.f32 %v952, 1.442695
    %v954 = vpow.pop %v953
    %v955 = vadd.f32 %v954, 1.0
    %v956 = vrcp.pop %v955
    %v957 = vmul.f32 %v955, %v956
    %v958 = vsub.f32 1.0, %v957
    %v959 = vmul.f32 %v956, %v958
    %v960 = vadd.f32 %v956, %v959
    %vm961 = vweird.f32 %v955
    %vm962 = vweird.f32 %v956
    %vm963 = vmor %vm961, %vm962
    %v964 = vsel %vm963, %v956, %v960
    %v965 = vand.u32 2147483647, %v955
    %vm966 = vcmp.eq.f32.partialorder %v965, 8.507059e+37
    %v967 = vand.u32 %v955, 2147483648
    %v968 = vor.u32 1.1754944e-38, %v967
    %v969 = vsel %vm966, %v968, %v964
    %v970 = vmul.f32 1.0, %v969
    %v971 = vtanh.pop %v931
    %v972 = vxor.u32 %v932, 2147483648
    %v973 = vmul.f32 %v972, 1.442695
    %v974 = vpow.pop %v973
    %v975 = vadd.f32 %v974, 1.0
    %v976 = vrcp.pop %v975
    %v977 = vmul.f32 %v975, %v976
    %v978 = vsub.f32 1.0, %v977
    %v979 = vmul.f32 %v976, %v978
    %v980 = vadd.f32 %v976, %v979
    %vm981 = vweird.f32 %v975
    %vm982 = vweird.f32 %v976
    %vm983 = vmor %vm981, %vm982
    %v984 = vsel %vm983, %v976, %v980
    %v985 = vand.u32 2147483647, %v975
    %vm986 = vcmp.eq.f32.partialorder %v985, 8.507059e+37
    %v987 = vand.u32 %v975, 2147483648
    %v988 = vor.u32 1.1754944e-38, %v987
    %v989 = vsel %vm986, %v988, %v984
    %v990 = vmul.f32 1.0, %v989
    %v991 = vmul.f32 %v970, %v868
    %v992 = vmul.f32 %v951, %v971
    %v993 = vadd.f32 %v991, %v992
    %v994 = vtanh.pop %v993
    %v995 = vmul.f32 %v990, %v994
    %s996 = scalar_lea.vmem [#allocation2], 192
    %v997 = vld [vmem:[%s996] sm:$0xff]
    %v998 = vld [vmem:[%s996 + $0x8] sm:$0xff]
    %v999 = vld [vmem:[%s996 + $0x10] sm:$0xff]
    %v1000 = vld [vmem:[%s996 + $0x18] sm:$0xff]
    %v1001 = vpack.c.bf16 %v995, %v995
    %1002 = vmatpush.bf16.msra.mxu0 %v216
    %1003 = vmatpush.bf16.msra.mxu0 %v212
    %1004 = vmatpush.bf16.msra.mxu0 %v208
    %1005 = vmatpush.bf16.msra.mxu0 %v204
    %1006 = vmatpush.bf16.msra.mxu0 %v200
    %1007 = vmatpush.bf16.msra.mxu0 %v196
    %1008 = vmatpush.bf16.msra.mxu0 %v192
    %1009 = vmatpush.bf16.msra.mxu0 %v188
    %1010 = vmatmul.bf16.gmra.mxu0 %v1001
    %v1011 = vpop.f32.mrf.mxu0
    %v1012 = vadd.f32 0.0, %v1011
    %v1013 = vpop.f32.mrf.mxu0
    %1014 = vdwg.mxu0
    %1015 = vmatpush.bf16.msra.mxu0 %v217
    %1016 = vmatpush.bf16.msra.mxu0 %v213
    %1017 = vmatpush.bf16.msra.mxu0 %v209
    %1018 = vmatpush.bf16.msra.mxu0 %v205
    %1019 = vmatpush.bf16.msra.mxu0 %v201
    %1020 = vmatpush.bf16.msra.mxu0 %v197
    %1021 = vmatpush.bf16.msra.mxu0 %v193
    %1022 = vmatpush.bf16.msra.mxu0 %v189
    %1023 = vmatmul.bf16.gmra.mxu0 %v1001
    %v1024 = vpop.f32.mrf.mxu0
    %v1025 = vadd.f32 0.0, %v1024
    %v1026 = vpop.f32.mrf.mxu0
    %1027 = vdwg.mxu0
    %1028 = vmatpush.bf16.msra.mxu0 %v218
    %1029 = vmatpush.bf16.msra.mxu0 %v214
    %1030 = vmatpush.bf16.msra.mxu0 %v210
    %1031 = vmatpush.bf16.msra.mxu0 %v206
    %1032 = vmatpush.bf16.msra.mxu0 %v202
    %1033 = vmatpush.bf16.msra.mxu0 %v198
    %1034 = vmatpush.bf16.msra.mxu0 %v194
    %1035 = vmatpush.bf16.msra.mxu0 %v190
    %1036 = vmatmul.bf16.gmra.mxu0 %v1001
    %v1037 = vpop.f32.mrf.mxu0
    %v1038 = vadd.f32 0.0, %v1037
    %v1039 = vpop.f32.mrf.mxu0
    %1040 = vdwg.mxu0
    %1041 = vmatpush.bf16.msra.mxu0 %v219
    %1042 = vmatpush.bf16.msra.mxu0 %v215
    %1043 = vmatpush.bf16.msra.mxu0 %v211
    %1044 = vmatpush.bf16.msra.mxu0 %v207
    %1045 = vmatpush.bf16.msra.mxu0 %v203
    %1046 = vmatpush.bf16.msra.mxu0 %v199
    %1047 = vmatpush.bf16.msra.mxu0 %v195
    %1048 = vmatpush.bf16.msra.mxu0 %v191
    %1049 = vmatmul.bf16.gmra.mxu0 %v1001
    %v1050 = vpop.f32.mrf.mxu0
    %v1051 = vadd.f32 0.0, %v1050
    %v1052 = vpop.f32.mrf.mxu0
    %1053 = vdwg.mxu0
    %v1054 = vadd.f32 %v997, %v1012
    %v1055 = vadd.f32 %v998, %v1025
    %v1056 = vadd.f32 %v999, %v1038
    %v1057 = vadd.f32 %v1000, %v1051
    %v1058 = vxor.u32 %v1054, 2147483648
    %v1059 = vmul.f32 %v1058, 1.442695
    %v1060 = vpow.pop %v1059
    %v1061 = vadd.f32 %v1060, 1.0
    %v1062 = vrcp.pop %v1061
    %v1063 = vmul.f32 %v1061, %v1062
    %v1064 = vsub.f32 1.0, %v1063
    %v1065 = vmul.f32 %v1062, %v1064
    %v1066 = vadd.f32 %v1062, %v1065
    %vm1067 = vweird.f32 %v1061
    %vm1068 = vweird.f32 %v1062
    %vm1069 = vmor %vm1067, %vm1068
    %v1070 = vsel %vm1069, %v1062, %v1066
    %v1071 = vand.u32 2147483647, %v1061
    %vm1072 = vcmp.eq.f32.partialorder %v1071, 8.507059e+37
    %v1073 = vand.u32 %v1061, 2147483648
    %v1074 = vor.u32 1.1754944e-38, %v1073
    %v1075 = vsel %vm1072, %v1074, %v1070
    %v1076 = vmul.f32 1.0, %v1075
    %v1077 = vxor.u32 %v1055, 2147483648
    %v1078 = vmul.f32 %v1077, 1.442695
    %v1079 = vpow.pop %v1078
    %v1080 = vadd.f32 %v1079, 1.0
    %v1081 = vrcp.pop %v1080
    %v1082 = vmul.f32 %v1080, %v1081
    %v1083 = vsub.f32 1.0, %v1082
    %v1084 = vmul.f32 %v1081, %v1083
    %v1085 = vadd.f32 %v1081, %v1084
    %vm1086 = vweird.f32 %v1080
    %vm1087 = vweird.f32 %v1081
    %vm1088 = vmor %vm1086, %vm1087
    %v1089 = vsel %vm1088, %v1081, %v1085
    %v1090 = vand.u32 2147483647, %v1080
    %vm1091 = vcmp.eq.f32.partialorder %v1090, 8.507059e+37
    %v1092 = vand.u32 %v1080, 2147483648
    %v1093 = vor.u32 1.1754944e-38, %v1092
    %v1094 = vsel %vm1091, %v1093, %v1089
    %v1095 = vmul.f32 1.0, %v1094
    %v1096 = vtanh.pop %v1056
    %v1097 = vxor.u32 %v1057, 2147483648
    %v1098 = vmul.f32 %v1097, 1.442695
    %v1099 = vpow.pop %v1098
    %v1100 = vadd.f32 %v1099, 1.0
    %v1101 = vrcp.pop %v1100
    %v1102 = vmul.f32 %v1100, %v1101
    %v1103 = vsub.f32 1.0, %v1102
    %v1104 = vmul.f32 %v1101, %v1103
    %v1105 = vadd.f32 %v1101, %v1104
    %vm1106 = vweird.f32 %v1100
    %vm1107 = vweird.f32 %v1101
    %vm1108 = vmor %vm1106, %vm1107
    %v1109 = vsel %vm1108, %v1101, %v1105
    %v1110 = vand.u32 2147483647, %v1100
    %vm1111 = vcmp.eq.f32.partialorder %v1110, 8.507059e+37
    %v1112 = vand.u32 %v1100, 2147483648
    %v1113 = vor.u32 1.1754944e-38, %v1112
    %v1114 = vsel %vm1111, %v1113, %v1109
    %v1115 = vmul.f32 1.0, %v1114
    %v1116 = vmul.f32 %v1095, %v993
    %v1117 = vmul.f32 %v1076, %v1096
    %v1118 = vadd.f32 %v1116, %v1117
    %v1119 = vtanh.pop %v1118
    %v1120 = vmul.f32 %v1115, %v1119
    %s1121 = scalar_lea.vmem [#allocation2], 224
    %v1122 = vld [vmem:[%s1121] sm:$0xff]
    %v1123 = vld [vmem:[%s1121 + $0x8] sm:$0xff]
    %v1124 = vld [vmem:[%s1121 + $0x10] sm:$0xff]
    %v1125 = vld [vmem:[%s1121 + $0x18] sm:$0xff]
    %v1126 = vpack.c.bf16 %v1120, %v1120
    %1127 = vmatpush.bf16.msra.mxu0 %v216
    %1128 = vmatpush.bf16.msra.mxu0 %v212
    %1129 = vmatpush.bf16.msra.mxu0 %v208
    %1130 = vmatpush.bf16.msra.mxu0 %v204
    %1131 = vmatpush.bf16.msra.mxu0 %v200
    %1132 = vmatpush.bf16.msra.mxu0 %v196
    %1133 = vmatpush.bf16.msra.mxu0 %v192
    %1134 = vmatpush.bf16.msra.mxu0 %v188
    %1135 = vmatmul.bf16.gmra.mxu0 %v1126
    %v1136 = vpop.f32.mrf.mxu0
    %v1137 = vadd.f32 0.0, %v1136
    %v1138 = vpop.f32.mrf.mxu0
    %1139 = vdwg.mxu0
    %1140 = vmatpush.bf16.msra.mxu0 %v217
    %1141 = vmatpush.bf16.msra.mxu0 %v213
    %1142 = vmatpush.bf16.msra.mxu0 %v209
    %1143 = vmatpush.bf16.msra.mxu0 %v205
    %1144 = vmatpush.bf16.msra.mxu0 %v201
    %1145 = vmatpush.bf16.msra.mxu0 %v197
    %1146 = vmatpush.bf16.msra.mxu0 %v193
    %1147 = vmatpush.bf16.msra.mxu0 %v189
    %1148 = vmatmul.bf16.gmra.mxu0 %v1126
    %v1149 = vpop.f32.mrf.mxu0
    %v1150 = vadd.f32 0.0, %v1149
    %v1151 = vpop.f32.mrf.mxu0
    %1152 = vdwg.mxu0
    %1153 = vmatpush.bf16.msra.mxu0 %v218
    %1154 = vmatpush.bf16.msra.mxu0 %v214
    %1155 = vmatpush.bf16.msra.mxu0 %v210
    %1156 = vmatpush.bf16.msra.mxu0 %v206
    %1157 = vmatpush.bf16.msra.mxu0 %v202
    %1158 = vmatpush.bf16.msra.mxu0 %v198
    %1159 = vmatpush.bf16.msra.mxu0 %v194
    %1160 = vmatpush.bf16.msra.mxu0 %v190
    %1161 = vmatmul.bf16.gmra.mxu0 %v1126
    %v1162 = vpop.f32.mrf.mxu0
    %v1163 = vadd.f32 0.0, %v1162
    %v1164 = vpop.f32.mrf.mxu0
    %1165 = vdwg.mxu0
    %1166 = vmatpush.bf16.msra.mxu0 %v219
    %1167 = vmatpush.bf16.msra.mxu0 %v215
    %1168 = vmatpush.bf16.msra.mxu0 %v211
    %1169 = vmatpush.bf16.msra.mxu0 %v207
    %1170 = vmatpush.bf16.msra.mxu0 %v203
    %1171 = vmatpush.bf16.msra.mxu0 %v199
    %1172 = vmatpush.bf16.msra.mxu0 %v195
    %1173 = vmatpush.bf16.msra.mxu0 %v191
    %1174 = vmatmul.bf16.gmra.mxu0 %v1126
    %v1175 = vpop.f32.mrf.mxu0
    %v1176 = vadd.f32 0.0, %v1175
    %v1177 = vpop.f32.mrf.mxu0
    %1178 = vdwg.mxu0
    %v1179 = vadd.f32 %v1122, %v1137
    %v1180 = vadd.f32 %v1123, %v1150
    %v1181 = vadd.f32 %v1124, %v1163
    %v1182 = vadd.f32 %v1125, %v1176
    %v1183 = vxor.u32 %v1179, 2147483648
    %v1184 = vmul.f32 %v1183, 1.442695
    %v1185 = vpow.pop %v1184
    %v1186 = vadd.f32 %v1185, 1.0
    %v1187 = vrcp.pop %v1186
    %v1188 = vmul.f32 %v1186, %v1187
    %v1189 = vsub.f32 1.0, %v1188
    %v1190 = vmul.f32 %v1187, %v1189
    %v1191 = vadd.f32 %v1187, %v1190
    %vm1192 = vweird.f32 %v1186
    %vm1193 = vweird.f32 %v1187
    %vm1194 = vmor %vm1192, %vm1193
    %v1195 = vsel %vm1194, %v1187, %v1191
    %v1196 = vand.u32 2147483647, %v1186
    %vm1197 = vcmp.eq.f32.partialorder %v1196, 8.507059e+37
    %v1198 = vand.u32 %v1186, 2147483648
    %v1199 = vor.u32 1.1754944e-38, %v1198
    %v1200 = vsel %vm1197, %v1199, %v1195
    %v1201 = vmul.f32 1.0, %v1200
    %v1202 = vxor.u32 %v1180, 2147483648
    %v1203 = vmul.f32 %v1202, 1.442695
    %v1204 = vpow.pop %v1203
    %v1205 = vadd.f32 %v1204, 1.0
    %v1206 = vrcp.pop %v1205
    %v1207 = vmul.f32 %v1205, %v1206
    %v1208 = vsub.f32 1.0, %v1207
    %v1209 = vmul.f32 %v1206, %v1208
    %v1210 = vadd.f32 %v1206, %v1209
    %vm1211 = vweird.f32 %v1205
    %vm1212 = vweird.f32 %v1206
    %vm1213 = vmor %vm1211, %vm1212
    %v1214 = vsel %vm1213, %v1206, %v1210
    %v1215 = vand.u32 2147483647, %v1205
    %vm1216 = vcmp.eq.f32.partialorder %v1215, 8.507059e+37
    %v1217 = vand.u32 %v1205, 2147483648
    %v1218 = vor.u32 1.1754944e-38, %v1217
    %v1219 = vsel %vm1216, %v1218, %v1214
    %v1220 = vmul.f32 1.0, %v1219
    %v1221 = vtanh.pop %v1181
    %v1222 = vxor.u32 %v1182, 2147483648
    %v1223 = vmul.f32 %v1222, 1.442695
    %v1224 = vpow.pop %v1223
    %v1225 = vadd.f32 %v1224, 1.0
    %v1226 = vrcp.pop %v1225
    %v1227 = vmul.f32 %v1225, %v1226
    %v1228 = vsub.f32 1.0, %v1227
    %v1229 = vmul.f32 %v1226, %v1228
    %v1230 = vadd.f32 %v1226, %v1229
    %vm1231 = vweird.f32 %v1225
    %vm1232 = vweird.f32 %v1226
    %vm1233 = vmor %vm1231, %vm1232
    %v1234 = vsel %vm1233, %v1226, %v1230
    %v1235 = vand.u32 2147483647, %v1225
    %vm1236 = vcmp.eq.f32.partialorder %v1235, 8.507059e+37
    %v1237 = vand.u32 %v1225, 2147483648
    %v1238 = vor.u32 1.1754944e-38, %v1237
    %v1239 = vsel %vm1236, %v1238, %v1234
    %v1240 = vmul.f32 1.0, %v1239
    %v1241 = vmul.f32 %v1220, %v1118
    %v1242 = vmul.f32 %v1201, %v1221
    %v1243 = vadd.f32 %v1241, %v1242
    %v1244 = vtanh.pop %v1243
    %v1245 = vmul.f32 %v1240, %v1244
    %1246 = vst [vmem:[#allocation7] sm:$0xff] %v1245
    %1247 = vst [vmem:[#allocation8] sm:$0xff] %v1243
    // Predicated region
    $region22: #{tpu_custom_call.1} parent=1 // pred_check
      _
    $region23: #{tpu_custom_call.1} parent=1 // pred_check_branch
      %1249 = sbr.rel (0) target = $region25
    $region24: #{tpu_custom_call.1} parent=1 // pred_region
      %1251 = vsyncadd [#allocation4], 0
      %s1253 = sshll.u32 [#allocation7], 4
      %s1254 = int_to_ptr.vmem [resolvable:$true] %s1253
      %s1255 = sshll.u32 %s2, 4
      %s1256 = int_to_ptr.hbm [resolvable:$true] %s1255
      %1258 = dma.vmem_to_hbm [thread:$0]  %s1254, 128, %s1256, [#allocation4]
    $region25: #{tpu_custom_call.1} parent=1 // pred_fallthru
      _
    // Predicated region
    $region26: #{tpu_custom_call.1} parent=1 // pred_check
      _
    $region27: #{tpu_custom_call.1} parent=1 // pred_check_branch
      %1260 = sbr.rel (0) target = $region29
    $region28: #{tpu_custom_call.1} parent=1 // pred_region
      %1262 = vsyncadd [#allocation9], 0
      %s1264 = sshll.u32 [#allocation8], 4
      %s1265 = int_to_ptr.vmem [resolvable:$true] %s1264
      %s1266 = sshll.u32 %s3, 4
      %s1267 = int_to_ptr.hbm [resolvable:$true] %s1266
      %1269 = dma.vmem_to_hbm [thread:$0]  %s1265, 128, %s1267, [#allocation9]
    $region29: #{tpu_custom_call.1} parent=1 // pred_fallthru
      _
    // Predicated region
    $region30: #{tpu_custom_call.1} parent=1 // pred_check
      _
    $region31: #{tpu_custom_call.1} parent=1 // pred_check_branch
      %1271 = sbr.rel (0) target = $region33
    $region32: #{tpu_custom_call.1} parent=1 // pred_region
      %1273 = dma.done [#allocation4], 128
    $region33: #{tpu_custom_call.1} parent=1 // pred_fallthru
      _
    // Predicated region
    $region34: #{tpu_custom_call.1} parent=1 // pred_check
      _
    $region35: #{tpu_custom_call.1} parent=1 // pred_check_branch
      %1275 = sbr.rel (0) target = $region37
    $region36: #{tpu_custom_call.1} parent=1 // pred_region
      %1277 = dma.done [#allocation9], 128
    $region37: #{tpu_custom_call.1} parent=1 // pred_fallthru
      _
    %1278 = vsyncpa [#allocation3], 1
    %1279 = vsyncpa [#allocation6], 1
    %1280 = vsyncpa [#allocation4], 1
    %1281 = vsyncpa [#allocation9], 1

</llo_original>
